<compile_context>
chip_gen: v6e
topology: v6e:2x2x1
jax: 0.10.0
libtpu: 0.0.40
codegen_flags: <defaults>
</compile_context>

<pallas_src>
import jax
import jax.numpy as jnp
from jax import lax
from jax.experimental import pallas as pl
from jax.experimental.pallas import tpu as pltpu


def vmem():
    return pl.BlockSpec(memory_space=pltpu.MemorySpace.VMEM)


def _leaky(x, slope):
    return jnp.where(x > 0, x, slope * x)


# ---------------------------------------------------------------------------
# Fused forward kernel.
#   GATConv (heads=1):  h = x @ W
#       e[i, j] = leaky_relu(a_dst.h_i + a_src.h_j, 0.2) for edge j -> i
#       alpha   = softmax_j(e masked by adj);  out_i = sum_j alpha[i,j] h_j + bias
#   GraphNorm: gamma * (x - mean_scale*mean_g) * rsqrt(var_g + eps) + beta
#   Head: global_mean_pool -> SOM BMU one-hot -> [pooled|onehot] @ W1 -> ReLU -> W2
# ---------------------------------------------------------------------------
def fused_kernel(x_ref, adj_ref, b_ref, bt_ref,
                 w1_ref, as1_ref, ad1_ref, bb1_ref,
                 w2_ref, as2_ref, ad2_ref, bb2_ref,
                 w3_ref, as3_ref, ad3_ref, bb3_ref,
                 gamma_ref, beta_ref, ms_ref,
                 somwt_ref,
                 rw1a_ref, rw1b_ref, rb1_ref, rw2_ref, rb2_ref,
                 o_ref):
    mask = adj_ref[...] > 0                                   # [N, N], computed once
    B = b_ref[...]                                            # [G, N]
    Bt = bt_ref[...]                                          # [N, G]
    cnt_inv = pl.reciprocal(jnp.sum(B, axis=-1, keepdims=True),
                            approx=True)                      # [G, 1]

    def gat(x, w_ref, asrc_ref, adst_ref, bias_ref):
        h = jnp.dot(x, w_ref[...], preferred_element_type=jnp.float32)       # [N, H]
        # per-node attention scores, kept 2-D (contract against the feature axis
        # directly so the "source" score lands in [1, N] without any transpose)
        d_col = lax.dot_general(h, adst_ref[...], (((1,), (1,)), ((), ())),
                                preferred_element_type=jnp.float32)           # [N, 1]
        s_row = lax.dot_general(asrc_ref[...], h, (((1,), (1,)), ((), ())),
                                preferred_element_type=jnp.float32)           # [1, N]
        e = _leaky(d_col + s_row, 0.2)                                        # [N, N]
        e = jnp.where(mask, e, -1e30)
        e = e - jnp.max(e, axis=-1, keepdims=True)
        p = jnp.exp(e)  # masked entries -> ~0; self-loops guarantee row-sum > 0
        alpha = p * pl.reciprocal(jnp.sum(p, axis=-1, keepdims=True), approx=True)
        return jnp.dot(alpha, h, preferred_element_type=jnp.float32) + bias_ref[...]

    x = x_ref[...]                                                            # [N, Fin]

    # --- gat1 + F.leaky_relu (slope 0.01) ---
    x1 = _leaky(gat(x, w1_ref, as1_ref, ad1_ref, bb1_ref), 0.01)

    # --- GraphNorm (dropout = identity in eval) ---
    mean = jnp.dot(B, x1, preferred_element_type=jnp.float32) * cnt_inv       # [G, H]
    sub = x1 - ms_ref[...] * jnp.dot(Bt, mean, preferred_element_type=jnp.float32)
    var = jnp.dot(B, sub * sub, preferred_element_type=jnp.float32) * cnt_inv  # [G, H]
    node_var = jnp.dot(Bt, var, preferred_element_type=jnp.float32)           # [N, H]
    xn = gamma_ref[...] * sub * lax.rsqrt(node_var + 1e-5) + beta_ref[...]

    # --- gat2 + F.leaky_relu ---
    x2 = _leaky(gat(xn, w2_ref, as2_ref, ad2_ref, bb2_ref), 0.01)

    # --- gat3 with residual: x2 + gat3(x2) ---
    x3 = x2 + gat(x2, w3_ref, as3_ref, ad3_ref, bb3_ref)

    # --- global_mean_pool ---
    pooled = jnp.dot(B, x3, preferred_element_type=jnp.float32) * cnt_inv     # [G, H]

    # --- SOM BMU one-hot (MiniSom activation_response of each pooled sample) ---
    somwt = somwt_ref[...]                                                    # [H, K]
    K = somwt.shape[1]
    w_sq = jnp.sum(somwt * somwt, axis=0, keepdims=True)                      # [1, K]
    p_sq = jnp.sum(pooled * pooled, axis=-1, keepdims=True)                   # [G, 1]
    d2 = (p_sq - 2.0 * jnp.dot(pooled, somwt, preferred_element_type=jnp.float32)
          + w_sq)                                                             # [G, K]
    idx = lax.broadcasted_iota(jnp.int32, d2.shape, 1)                        # [G, K]
    dmin = jnp.min(d2, axis=-1, keepdims=True)
    first = jnp.min(jnp.where(d2 <= dmin, idx, jnp.int32(K)),
                    axis=-1, keepdims=True)                                   # lowest-index BMU
    som_out = (idx == first).astype(jnp.float32)                              # [G, K]

    # --- regressor: Linear(64+K, 64) -> ReLU -> Linear(64, P)
    #     (the concat is realized as a split weight matrix)
    h1 = (jnp.dot(pooled, rw1a_ref[...], preferred_element_type=jnp.float32)
          + jnp.dot(som_out, rw1b_ref[...], preferred_element_type=jnp.float32)
          + rb1_ref[...])
    h1 = jnp.maximum(h1, 0.0)
    o_ref[...] = (jnp.dot(h1, rw2_ref[...], preferred_element_type=jnp.float32)
                  + rb2_ref[...])


# ---------------------------------------------------------------------------
# Wrapper: single pallas_call, everything resident in VMEM (a few hundred KiB).
# ---------------------------------------------------------------------------
@jax.jit
def multi_property_predictor(x, adj, B, Bt, params):
    G = B.shape[0]
    P = params["reg"]["W2"].shape[1]
    args = (
        x, adj, B, Bt,
        params["gat1"]["W"], params["gat1"]["a_src"], params["gat1"]["a_dst"], params["gat1"]["bias"],
        params["gat2"]["W"], params["gat2"]["a_src"], params["gat2"]["a_dst"], params["gat2"]["bias"],
        params["gat3"]["W"], params["gat3"]["a_src"], params["gat3"]["a_dst"], params["gat3"]["bias"],
        params["norm"]["gamma"], params["norm"]["beta"], params["norm"]["mean_scale"],
        params["som_wT"],
        params["reg"]["W1a"], params["reg"]["W1b"], params["reg"]["b1"],
        params["reg"]["W2"], params["reg"]["b2"],
    )
    return pl.pallas_call(
        fused_kernel,
        out_shape=jax.ShapeDtypeStruct((G, P), jnp.float32),
        in_specs=[vmem() for _ in range(len(args))],
        out_specs=vmem(),
        cost_estimate=pl.CostEstimate(
            flops=600_000, transcendentals=2_048, bytes_accessed=150_000),
    )(*args)


def init_params(key, *, f_in=9, hidden=64, som_k=9, num_properties=4):
    ks = jax.random.split(key, 12)

    def glorot(k, shape):
        lim = (6.0 / (shape[0] + shape[1])) ** 0.5
        return jax.random.uniform(k, shape, jnp.float32, -lim, lim)

    def gat_params(k, fin, fout):
        k0, k1, k2 = jax.random.split(k, 3)
        return {"W": glorot(k0, (fin, fout)),
                "a_src": glorot(k1, (1, fout)),
                "a_dst": glorot(k2, (1, fout)),
                "bias": jnp.zeros((1, fout), jnp.float32)}

    return {
        "gat1": gat_params(ks[0], f_in, hidden),
        "gat2": gat_params(ks[1], hidden, hidden),
        "gat3": gat_params(ks[2], hidden, hidden),
        "norm": {"gamma": jnp.ones((1, hidden), jnp.float32),
                 "beta": jnp.zeros((1, hidden), jnp.float32),
                 "mean_scale": jnp.ones((1, hidden), jnp.float32)},
        # SOM codebook (m*n=9 neurons, dim=64), stored pre-transposed [dim, 9]
        "som_wT": jax.random.uniform(ks[3], (hidden, som_k), jnp.float32),
        "reg": {"W1a": glorot(ks[4], (hidden, hidden)),
                "W1b": glorot(ks[5], (som_k, hidden)),
                "b1": jnp.zeros((1, hidden), jnp.float32),
                "W2": glorot(ks[6], (hidden, num_properties)),
                "b2": jnp.zeros((1, num_properties), jnp.float32)},
    }


if __name__ == "__main__":
    N, G, F_IN, P = 16, 2, 9, 4
    key = jax.random.PRNGKey(0)
    k_x, k_p = jax.random.split(key)

    # node features
    x = jax.random.normal(k_x, (N, F_IN), jnp.float32)

    # two graphs of 8 nodes each: undirected ring within each graph + self-loops
    adj_py = [[0.0] * N for _ in range(N)]
    per_graph = N // G
    for g in range(G):
        base = g * per_graph
        for i in range(per_graph):
            a = base + i
            b = base + (i + 1) % per_graph
            adj_py[a][b] = 1.0   # edge b -> a
            adj_py[b][a] = 1.0   # edge a -> b
    for i in range(N):
        adj_py[i][i] = 1.0       # self-loops (GATConv add_self_loops=True)
    adj = jnp.array(adj_py, dtype=jnp.float32)

    # one-hot batch matrix, built host-side in BOTH orientations (no XLA transpose op)
    batch = [n // per_graph for n in range(N)]
    B = jnp.array([[1.0 if batch[n] == g else 0.0 for n in range(N)] for g in range(G)],
                  dtype=jnp.float32)
    Bt = jnp.array([[1.0 if batch[n] == g else 0.0 for g in range(G)] for n in range(N)],
                   dtype=jnp.float32)

    params = init_params(k_p, f_in=F_IN, hidden=64, som_k=9, num_properties=P)

    out = multi_property_predictor(x, adj, B, Bt, params)
    out = jax.block_until_ready(out)
    assert out.shape == (G, P) and out.dtype == jnp.float32
    print("KERNEL_OK")
</pallas_src>

<mosaic_0001>
module attributes {stable_mosaic.version = 11 : i64} {
  func.func @fused_kernel(%arg0: memref<16x9xf32, #tpu.memory_space<vmem>>, %arg1: memref<16x16xf32, #tpu.memory_space<vmem>>, %arg2: memref<2x16xf32, #tpu.memory_space<vmem>>, %arg3: memref<16x2xf32, #tpu.memory_space<vmem>>, %arg4: memref<9x64xf32, #tpu.memory_space<vmem>>, %arg5: memref<1x64xf32, #tpu.memory_space<vmem>>, %arg6: memref<1x64xf32, #tpu.memory_space<vmem>>, %arg7: memref<1x64xf32, #tpu.memory_space<vmem>>, %arg8: memref<64x64xf32, #tpu.memory_space<vmem>>, %arg9: memref<1x64xf32, #tpu.memory_space<vmem>>, %arg10: memref<1x64xf32, #tpu.memory_space<vmem>>, %arg11: memref<1x64xf32, #tpu.memory_space<vmem>>, %arg12: memref<64x64xf32, #tpu.memory_space<vmem>>, %arg13: memref<1x64xf32, #tpu.memory_space<vmem>>, %arg14: memref<1x64xf32, #tpu.memory_space<vmem>>, %arg15: memref<1x64xf32, #tpu.memory_space<vmem>>, %arg16: memref<1x64xf32, #tpu.memory_space<vmem>>, %arg17: memref<1x64xf32, #tpu.memory_space<vmem>>, %arg18: memref<1x64xf32, #tpu.memory_space<vmem>>, %arg19: memref<64x9xf32, #tpu.memory_space<vmem>>, %arg20: memref<64x64xf32, #tpu.memory_space<vmem>>, %arg21: memref<9x64xf32, #tpu.memory_space<vmem>>, %arg22: memref<1x64xf32, #tpu.memory_space<vmem>>, %arg23: memref<64x4xf32, #tpu.memory_space<vmem>>, %arg24: memref<1x4xf32, #tpu.memory_space<vmem>>, %arg25: memref<2x4xf32, #tpu.memory_space<vmem>>) attributes {dimension_semantics = [], scalar_prefetch = 0 : i64, scratch_operands = 0 : i64, tpu.core_type = #tpu.core_type<tc>} {
    %c0 = arith.constant 0 : index
    %c0_0 = arith.constant 0 : index
    %0 = vector.load %arg1[%c0, %c0_0] : memref<16x16xf32, #tpu.memory_space<vmem>>, vector<16x16xf32>
    %cst = arith.constant 0.000000e+00 : f32
    %1 = vector.broadcast %cst : f32 to vector<16x16xf32>
    %2 = arith.cmpf ogt, %0, %1 : vector<16x16xf32>
    %c0_1 = arith.constant 0 : index
    %c0_2 = arith.constant 0 : index
    %3 = vector.load %arg2[%c0_1, %c0_2] : memref<2x16xf32, #tpu.memory_space<vmem>>, vector<2x16xf32>
    %c0_3 = arith.constant 0 : index
    %c0_4 = arith.constant 0 : index
    %4 = vector.load %arg3[%c0_3, %c0_4] : memref<16x2xf32, #tpu.memory_space<vmem>>, vector<16x2xf32>
    %cst_5 = arith.constant dense<0.000000e+00> : vector<2xf32>
    %5 = vector.multi_reduction <add>, %3, %cst_5 [1] : vector<2x16xf32> to vector<2xf32>
    %6 = vector.shape_cast %5 : vector<2xf32> to vector<2x1xf32>
    %7 = tpu.reciprocal %6 {approx = true} : vector<2x1xf32> -> vector<2x1xf32>
    %c0_6 = arith.constant 0 : index
    %c0_7 = arith.constant 0 : index
    %8 = vector.load %arg0[%c0_6, %c0_7] : memref<16x9xf32, #tpu.memory_space<vmem>>, vector<16x9xf32>
    %c0_8 = arith.constant 0 : index
    %c0_9 = arith.constant 0 : index
    %9 = vector.load %arg4[%c0_8, %c0_9] : memref<9x64xf32, #tpu.memory_space<vmem>>, vector<9x64xf32>
    %cst_10 = arith.constant dense<0.000000e+00> : vector<16x64xf32>
    %10 = tpu.matmul %8, %9, %cst_10 {dimension_numbers = #tpu.dot_dimension_numbers<[1], [0], [0], [1], [0, 0, 1, 1], [], []>} : vector<16x9xf32>, vector<9x64xf32>, vector<16x64xf32> -> vector<16x64xf32>
    %c0_11 = arith.constant 0 : index
    %c0_12 = arith.constant 0 : index
    %11 = vector.load %arg6[%c0_11, %c0_12] : memref<1x64xf32, #tpu.memory_space<vmem>>, vector<1x64xf32>
    %cst_13 = arith.constant dense<0.000000e+00> : vector<16x1xf32>
    %12 = tpu.matmul %10, %11, %cst_13 {dimension_numbers = #tpu.dot_dimension_numbers<[1], [1], [0], [0], [0, 0, 1, 0], [], []>} : vector<16x64xf32>, vector<1x64xf32>, vector<16x1xf32> -> vector<16x1xf32>
    %c0_14 = arith.constant 0 : index
    %c0_15 = arith.constant 0 : index
    %13 = vector.load %arg5[%c0_14, %c0_15] : memref<1x64xf32, #tpu.memory_space<vmem>>, vector<1x64xf32>
    %cst_16 = arith.constant dense<0.000000e+00> : vector<1x16xf32>
    %14 = tpu.matmul %13, %10, %cst_16 {dimension_numbers = #tpu.dot_dimension_numbers<[1], [1], [0], [0], [0, 0, 1, 0], [], []>} : vector<1x64xf32>, vector<16x64xf32>, vector<1x16xf32> -> vector<1x16xf32>
    %15 = vector.broadcast %12 : vector<16x1xf32> to vector<16x16xf32>
    %16 = vector.broadcast %14 : vector<1x16xf32> to vector<16x16xf32>
    %17 = arith.addf %15, %16 : vector<16x16xf32>
    %cst_17 = arith.constant 0.000000e+00 : f32
    %18 = vector.broadcast %cst_17 : f32 to vector<16x16xf32>
    %19 = arith.cmpf ogt, %17, %18 : vector<16x16xf32>
    %cst_18 = arith.constant 2.000000e-01 : f32
    %20 = vector.broadcast %cst_18 : f32 to vector<16x16xf32>
    %21 = arith.mulf %20, %17 : vector<16x16xf32>
    %22 = arith.select %19, %17, %21 : vector<16x16xi1>, vector<16x16xf32>
    %cst_19 = arith.constant -1.000000e+30 : f32
    %23 = vector.broadcast %cst_19 : f32 to vector<16x16xf32>
    %24 = arith.select %2, %22, %23 : vector<16x16xi1>, vector<16x16xf32>
    %cst_20 = arith.constant dense<0xFF800000> : vector<16xf32>
    %25 = vector.multi_reduction <maximumf>, %24, %cst_20 [1] : vector<16x16xf32> to vector<16xf32>
    %26 = vector.shape_cast %25 : vector<16xf32> to vector<16x1xf32>
    %27 = vector.broadcast %26 : vector<16x1xf32> to vector<16x16xf32>
    %28 = arith.subf %24, %27 : vector<16x16xf32>
    %29 = math.exp %28 : vector<16x16xf32>
    %cst_21 = arith.constant dense<0.000000e+00> : vector<16xf32>
    %30 = vector.multi_reduction <add>, %29, %cst_21 [1] : vector<16x16xf32> to vector<16xf32>
    %31 = vector.shape_cast %30 : vector<16xf32> to vector<16x1xf32>
    %32 = tpu.reciprocal %31 {approx = true} : vector<16x1xf32> -> vector<16x1xf32>
    %33 = vector.broadcast %32 : vector<16x1xf32> to vector<16x16xf32>
    %34 = arith.mulf %29, %33 : vector<16x16xf32>
    %cst_22 = arith.constant dense<0.000000e+00> : vector<16x64xf32>
    %35 = tpu.matmul %34, %10, %cst_22 {dimension_numbers = #tpu.dot_dimension_numbers<[1], [0], [0], [1], [0, 0, 1, 1], [], []>} : vector<16x16xf32>, vector<16x64xf32>, vector<16x64xf32> -> vector<16x64xf32>
    %c0_23 = arith.constant 0 : index
    %c0_24 = arith.constant 0 : index
    %36 = vector.load %arg7[%c0_23, %c0_24] : memref<1x64xf32, #tpu.memory_space<vmem>>, vector<1x64xf32>
    %37 = vector.broadcast %36 : vector<1x64xf32> to vector<16x64xf32>
    %38 = arith.addf %35, %37 : vector<16x64xf32>
    %cst_25 = arith.constant 0.000000e+00 : f32
    %39 = vector.broadcast %cst_25 : f32 to vector<16x64xf32>
    %40 = arith.cmpf ogt, %38, %39 : vector<16x64xf32>
    %cst_26 = arith.constant 0.00999999977 : f32
    %41 = vector.broadcast %cst_26 : f32 to vector<16x64xf32>
    %42 = arith.mulf %41, %38 : vector<16x64xf32>
    %43 = arith.select %40, %38, %42 : vector<16x64xi1>, vector<16x64xf32>
    %cst_27 = arith.constant dense<0.000000e+00> : vector<2x64xf32>
    %44 = tpu.matmul %3, %43, %cst_27 {dimension_numbers = #tpu.dot_dimension_numbers<[1], [0], [0], [1], [0, 0, 1, 1], [], []>} : vector<2x16xf32>, vector<16x64xf32>, vector<2x64xf32> -> vector<2x64xf32>
    %45 = vector.broadcast %7 : vector<2x1xf32> to vector<2x64xf32>
    %46 = arith.mulf %44, %45 : vector<2x64xf32>
    %c0_28 = arith.constant 0 : index
    %c0_29 = arith.constant 0 : index
    %47 = vector.load %arg18[%c0_28, %c0_29] : memref<1x64xf32, #tpu.memory_space<vmem>>, vector<1x64xf32>
    %cst_30 = arith.constant dense<0.000000e+00> : vector<16x64xf32>
    %48 = tpu.matmul %4, %46, %cst_30 {dimension_numbers = #tpu.dot_dimension_numbers<[1], [0], [0], [1], [0, 0, 1, 1], [], []>} : vector<16x2xf32>, vector<2x64xf32>, vector<16x64xf32> -> vector<16x64xf32>
    %49 = vector.broadcast %47 : vector<1x64xf32> to vector<16x64xf32>
    %50 = arith.mulf %49, %48 : vector<16x64xf32>
    %51 = arith.subf %43, %50 : vector<16x64xf32>
    %52 = arith.mulf %51, %51 : vector<16x64xf32>
    %cst_31 = arith.constant dense<0.000000e+00> : vector<2x64xf32>
    %53 = tpu.matmul %3, %52, %cst_31 {dimension_numbers = #tpu.dot_dimension_numbers<[1], [0], [0], [1], [0, 0, 1, 1], [], []>} : vector<2x16xf32>, vector<16x64xf32>, vector<2x64xf32> -> vector<2x64xf32>
    %54 = vector.broadcast %7 : vector<2x1xf32> to vector<2x64xf32>
    %55 = arith.mulf %53, %54 : vector<2x64xf32>
    %cst_32 = arith.constant dense<0.000000e+00> : vector<16x64xf32>
    %56 = tpu.matmul %4, %55, %cst_32 {dimension_numbers = #tpu.dot_dimension_numbers<[1], [0], [0], [1], [0, 0, 1, 1], [], []>} : vector<16x2xf32>, vector<2x64xf32>, vector<16x64xf32> -> vector<16x64xf32>
    %c0_33 = arith.constant 0 : index
    %c0_34 = arith.constant 0 : index
    %57 = vector.load %arg16[%c0_33, %c0_34] : memref<1x64xf32, #tpu.memory_space<vmem>>, vector<1x64xf32>
    %58 = vector.broadcast %57 : vector<1x64xf32> to vector<16x64xf32>
    %59 = arith.mulf %58, %51 : vector<16x64xf32>
    %cst_35 = arith.constant 9.99999974E-6 : f32
    %60 = vector.broadcast %cst_35 : f32 to vector<16x64xf32>
    %61 = arith.addf %56, %60 : vector<16x64xf32>
    %62 = math.rsqrt %61 : vector<16x64xf32>
    %63 = arith.mulf %59, %62 : vector<16x64xf32>
    %c0_36 = arith.constant 0 : index
    %c0_37 = arith.constant 0 : index
    %64 = vector.load %arg17[%c0_36, %c0_37] : memref<1x64xf32, #tpu.memory_space<vmem>>, vector<1x64xf32>
    %65 = vector.broadcast %64 : vector<1x64xf32> to vector<16x64xf32>
    %66 = arith.addf %63, %65 : vector<16x64xf32>
    %c0_38 = arith.constant 0 : index
    %c0_39 = arith.constant 0 : index
    %67 = vector.load %arg8[%c0_38, %c0_39] : memref<64x64xf32, #tpu.memory_space<vmem>>, vector<64x64xf32>
    %cst_40 = arith.constant dense<0.000000e+00> : vector<16x64xf32>
    %68 = tpu.matmul %66, %67, %cst_40 {dimension_numbers = #tpu.dot_dimension_numbers<[1], [0], [0], [1], [0, 0, 1, 1], [], []>} : vector<16x64xf32>, vector<64x64xf32>, vector<16x64xf32> -> vector<16x64xf32>
    %c0_41 = arith.constant 0 : index
    %c0_42 = arith.constant 0 : index
    %69 = vector.load %arg10[%c0_41, %c0_42] : memref<1x64xf32, #tpu.memory_space<vmem>>, vector<1x64xf32>
    %cst_43 = arith.constant dense<0.000000e+00> : vector<16x1xf32>
    %70 = tpu.matmul %68, %69, %cst_43 {dimension_numbers = #tpu.dot_dimension_numbers<[1], [1], [0], [0], [0, 0, 1, 0], [], []>} : vector<16x64xf32>, vector<1x64xf32>, vector<16x1xf32> -> vector<16x1xf32>
    %c0_44 = arith.constant 0 : index
    %c0_45 = arith.constant 0 : index
    %71 = vector.load %arg9[%c0_44, %c0_45] : memref<1x64xf32, #tpu.memory_space<vmem>>, vector<1x64xf32>
    %cst_46 = arith.constant dense<0.000000e+00> : vector<1x16xf32>
    %72 = tpu.matmul %71, %68, %cst_46 {dimension_numbers = #tpu.dot_dimension_numbers<[1], [1], [0], [0], [0, 0, 1, 0], [], []>} : vector<1x64xf32>, vector<16x64xf32>, vector<1x16xf32> -> vector<1x16xf32>
    %73 = vector.broadcast %70 : vector<16x1xf32> to vector<16x16xf32>
    %74 = vector.broadcast %72 : vector<1x16xf32> to vector<16x16xf32>
    %75 = arith.addf %73, %74 : vector<16x16xf32>
    %cst_47 = arith.constant 0.000000e+00 : f32
    %76 = vector.broadcast %cst_47 : f32 to vector<16x16xf32>
    %77 = arith.cmpf ogt, %75, %76 : vector<16x16xf32>
    %cst_48 = arith.constant 2.000000e-01 : f32
    %78 = vector.broadcast %cst_48 : f32 to vector<16x16xf32>
    %79 = arith.mulf %78, %75 : vector<16x16xf32>
    %80 = arith.select %77, %75, %79 : vector<16x16xi1>, vector<16x16xf32>
    %cst_49 = arith.constant -1.000000e+30 : f32
    %81 = vector.broadcast %cst_49 : f32 to vector<16x16xf32>
    %82 = arith.select %2, %80, %81 : vector<16x16xi1>, vector<16x16xf32>
    %cst_50 = arith.constant dense<0xFF800000> : vector<16xf32>
    %83 = vector.multi_reduction <maximumf>, %82, %cst_50 [1] : vector<16x16xf32> to vector<16xf32>
    %84 = vector.shape_cast %83 : vector<16xf32> to vector<16x1xf32>
    %85 = vector.broadcast %84 : vector<16x1xf32> to vector<16x16xf32>
    %86 = arith.subf %82, %85 : vector<16x16xf32>
    %87 = math.exp %86 : vector<16x16xf32>
    %cst_51 = arith.constant dense<0.000000e+00> : vector<16xf32>
    %88 = vector.multi_reduction <add>, %87, %cst_51 [1] : vector<16x16xf32> to vector<16xf32>
    %89 = vector.shape_cast %88 : vector<16xf32> to vector<16x1xf32>
    %90 = tpu.reciprocal %89 {approx = true} : vector<16x1xf32> -> vector<16x1xf32>
    %91 = vector.broadcast %90 : vector<16x1xf32> to vector<16x16xf32>
    %92 = arith.mulf %87, %91 : vector<16x16xf32>
    %cst_52 = arith.constant dense<0.000000e+00> : vector<16x64xf32>
    %93 = tpu.matmul %92, %68, %cst_52 {dimension_numbers = #tpu.dot_dimension_numbers<[1], [0], [0], [1], [0, 0, 1, 1], [], []>} : vector<16x16xf32>, vector<16x64xf32>, vector<16x64xf32> -> vector<16x64xf32>
    %c0_53 = arith.constant 0 : index
    %c0_54 = arith.constant 0 : index
    %94 = vector.load %arg11[%c0_53, %c0_54] : memref<1x64xf32, #tpu.memory_space<vmem>>, vector<1x64xf32>
    %95 = vector.broadcast %94 : vector<1x64xf32> to vector<16x64xf32>
    %96 = arith.addf %93, %95 : vector<16x64xf32>
    %cst_55 = arith.constant 0.000000e+00 : f32
    %97 = vector.broadcast %cst_55 : f32 to vector<16x64xf32>
    %98 = arith.cmpf ogt, %96, %97 : vector<16x64xf32>
    %cst_56 = arith.constant 0.00999999977 : f32
    %99 = vector.broadcast %cst_56 : f32 to vector<16x64xf32>
    %100 = arith.mulf %99, %96 : vector<16x64xf32>
    %101 = arith.select %98, %96, %100 : vector<16x64xi1>, vector<16x64xf32>
    %c0_57 = arith.constant 0 : index
    %c0_58 = arith.constant 0 : index
    %102 = vector.load %arg12[%c0_57, %c0_58] : memref<64x64xf32, #tpu.memory_space<vmem>>, vector<64x64xf32>
    %cst_59 = arith.constant dense<0.000000e+00> : vector<16x64xf32>
    %103 = tpu.matmul %101, %102, %cst_59 {dimension_numbers = #tpu.dot_dimension_numbers<[1], [0], [0], [1], [0, 0, 1, 1], [], []>} : vector<16x64xf32>, vector<64x64xf32>, vector<16x64xf32> -> vector<16x64xf32>
    %c0_60 = arith.constant 0 : index
    %c0_61 = arith.constant 0 : index
    %104 = vector.load %arg14[%c0_60, %c0_61] : memref<1x64xf32, #tpu.memory_space<vmem>>, vector<1x64xf32>
    %cst_62 = arith.constant dense<0.000000e+00> : vector<16x1xf32>
    %105 = tpu.matmul %103, %104, %cst_62 {dimension_numbers = #tpu.dot_dimension_numbers<[1], [1], [0], [0], [0, 0, 1, 0], [], []>} : vector<16x64xf32>, vector<1x64xf32>, vector<16x1xf32> -> vector<16x1xf32>
    %c0_63 = arith.constant 0 : index
    %c0_64 = arith.constant 0 : index
    %106 = vector.load %arg13[%c0_63, %c0_64] : memref<1x64xf32, #tpu.memory_space<vmem>>, vector<1x64xf32>
    %cst_65 = arith.constant dense<0.000000e+00> : vector<1x16xf32>
    %107 = tpu.matmul %106, %103, %cst_65 {dimension_numbers = #tpu.dot_dimension_numbers<[1], [1], [0], [0], [0, 0, 1, 0], [], []>} : vector<1x64xf32>, vector<16x64xf32>, vector<1x16xf32> -> vector<1x16xf32>
    %108 = vector.broadcast %105 : vector<16x1xf32> to vector<16x16xf32>
    %109 = vector.broadcast %107 : vector<1x16xf32> to vector<16x16xf32>
    %110 = arith.addf %108, %109 : vector<16x16xf32>
    %cst_66 = arith.constant 0.000000e+00 : f32
    %111 = vector.broadcast %cst_66 : f32 to vector<16x16xf32>
    %112 = arith.cmpf ogt, %110, %111 : vector<16x16xf32>
    %cst_67 = arith.constant 2.000000e-01 : f32
    %113 = vector.broadcast %cst_67 : f32 to vector<16x16xf32>
    %114 = arith.mulf %113, %110 : vector<16x16xf32>
    %115 = arith.select %112, %110, %114 : vector<16x16xi1>, vector<16x16xf32>
    %cst_68 = arith.constant -1.000000e+30 : f32
    %116 = vector.broadcast %cst_68 : f32 to vector<16x16xf32>
    %117 = arith.select %2, %115, %116 : vector<16x16xi1>, vector<16x16xf32>
    %cst_69 = arith.constant dense<0xFF800000> : vector<16xf32>
    %118 = vector.multi_reduction <maximumf>, %117, %cst_69 [1] : vector<16x16xf32> to vector<16xf32>
    %119 = vector.shape_cast %118 : vector<16xf32> to vector<16x1xf32>
    %120 = vector.broadcast %119 : vector<16x1xf32> to vector<16x16xf32>
    %121 = arith.subf %117, %120 : vector<16x16xf32>
    %122 = math.exp %121 : vector<16x16xf32>
    %cst_70 = arith.constant dense<0.000000e+00> : vector<16xf32>
    %123 = vector.multi_reduction <add>, %122, %cst_70 [1] : vector<16x16xf32> to vector<16xf32>
    %124 = vector.shape_cast %123 : vector<16xf32> to vector<16x1xf32>
    %125 = tpu.reciprocal %124 {approx = true} : vector<16x1xf32> -> vector<16x1xf32>
    %126 = vector.broadcast %125 : vector<16x1xf32> to vector<16x16xf32>
    %127 = arith.mulf %122, %126 : vector<16x16xf32>
    %cst_71 = arith.constant dense<0.000000e+00> : vector<16x64xf32>
    %128 = tpu.matmul %127, %103, %cst_71 {dimension_numbers = #tpu.dot_dimension_numbers<[1], [0], [0], [1], [0, 0, 1, 1], [], []>} : vector<16x16xf32>, vector<16x64xf32>, vector<16x64xf32> -> vector<16x64xf32>
    %c0_72 = arith.constant 0 : index
    %c0_73 = arith.constant 0 : index
    %129 = vector.load %arg15[%c0_72, %c0_73] : memref<1x64xf32, #tpu.memory_space<vmem>>, vector<1x64xf32>
    %130 = vector.broadcast %129 : vector<1x64xf32> to vector<16x64xf32>
    %131 = arith.addf %128, %130 : vector<16x64xf32>
    %132 = arith.addf %101, %131 : vector<16x64xf32>
    %cst_74 = arith.constant dense<0.000000e+00> : vector<2x64xf32>
    %133 = tpu.matmul %3, %132, %cst_74 {dimension_numbers = #tpu.dot_dimension_numbers<[1], [0], [0], [1], [0, 0, 1, 1], [], []>} : vector<2x16xf32>, vector<16x64xf32>, vector<2x64xf32> -> vector<2x64xf32>
    %134 = vector.broadcast %7 : vector<2x1xf32> to vector<2x64xf32>
    %135 = arith.mulf %133, %134 : vector<2x64xf32>
    %c0_75 = arith.constant 0 : index
    %c0_76 = arith.constant 0 : index
    %136 = vector.load %arg19[%c0_75, %c0_76] : memref<64x9xf32, #tpu.memory_space<vmem>>, vector<64x9xf32>
    %137 = arith.mulf %136, %136 : vector<64x9xf32>
    %cst_77 = arith.constant dense<0.000000e+00> : vector<9xf32>
    %138 = vector.multi_reduction <add>, %137, %cst_77 [0] : vector<64x9xf32> to vector<9xf32>
    %139 = vector.shape_cast %138 : vector<9xf32> to vector<1x9xf32>
    %140 = arith.mulf %135, %135 : vector<2x64xf32>
    %cst_78 = arith.constant dense<0.000000e+00> : vector<2xf32>
    %141 = vector.multi_reduction <add>, %140, %cst_78 [1] : vector<2x64xf32> to vector<2xf32>
    %142 = vector.shape_cast %141 : vector<2xf32> to vector<2x1xf32>
    %cst_79 = arith.constant dense<0.000000e+00> : vector<2x9xf32>
    %143 = tpu.matmul %135, %136, %cst_79 {dimension_numbers = #tpu.dot_dimension_numbers<[1], [0], [0], [1], [0, 0, 1, 1], [], []>} : vector<2x64xf32>, vector<64x9xf32>, vector<2x9xf32> -> vector<2x9xf32>
    %cst_80 = arith.constant 2.000000e+00 : f32
    %144 = vector.broadcast %cst_80 : f32 to vector<2x9xf32>
    %145 = arith.mulf %144, %143 : vector<2x9xf32>
    %146 = vector.broadcast %142 : vector<2x1xf32> to vector<2x9xf32>
    %147 = arith.subf %146, %145 : vector<2x9xf32>
    %148 = vector.broadcast %139 : vector<1x9xf32> to vector<2x9xf32>
    %149 = arith.addf %147, %148 : vector<2x9xf32>
    %150 = tpu.iota {dimensions = array<i32: 1>} : vector<2x9xi32>
    %cst_81 = arith.constant dense<0x7F800000> : vector<2xf32>
    %151 = vector.multi_reduction <minimumf>, %149, %cst_81 [1] : vector<2x9xf32> to vector<2xf32>
    %152 = vector.shape_cast %151 : vector<2xf32> to vector<2x1xf32>
    %153 = vector.broadcast %152 : vector<2x1xf32> to vector<2x9xf32>
    %154 = arith.cmpf ole, %149, %153 : vector<2x9xf32>
    %c9_i32 = arith.constant 9 : i32
    %155 = vector.broadcast %c9_i32 : i32 to vector<2x9xi32>
    %156 = arith.select %154, %150, %155 : vector<2x9xi1>, vector<2x9xi32>
    %cst_82 = arith.constant dense<2147483647> : vector<2xi32>
    %157 = vector.multi_reduction <minsi>, %156, %cst_82 [1] : vector<2x9xi32> to vector<2xi32>
    %158 = vector.shape_cast %157 : vector<2xi32> to vector<2x1xi32>
    %159 = vector.broadcast %158 : vector<2x1xi32> to vector<2x9xi32>
    %160 = arith.cmpi eq, %150, %159 : vector<2x9xi32>
    %161 = arith.extui %160 : vector<2x9xi1> to vector<2x9xi32>
    %162 = arith.sitofp %161 : vector<2x9xi32> to vector<2x9xf32>
    %c0_83 = arith.constant 0 : index
    %c0_84 = arith.constant 0 : index
    %163 = vector.load %arg20[%c0_83, %c0_84] : memref<64x64xf32, #tpu.memory_space<vmem>>, vector<64x64xf32>
    %cst_85 = arith.constant dense<0.000000e+00> : vector<2x64xf32>
    %164 = tpu.matmul %135, %163, %cst_85 {dimension_numbers = #tpu.dot_dimension_numbers<[1], [0], [0], [1], [0, 0, 1, 1], [], []>} : vector<2x64xf32>, vector<64x64xf32>, vector<2x64xf32> -> vector<2x64xf32>
    %c0_86 = arith.constant 0 : index
    %c0_87 = arith.constant 0 : index
    %165 = vector.load %arg21[%c0_86, %c0_87] : memref<9x64xf32, #tpu.memory_space<vmem>>, vector<9x64xf32>
    %cst_88 = arith.constant dense<0.000000e+00> : vector<2x64xf32>
    %166 = tpu.matmul %162, %165, %cst_88 {dimension_numbers = #tpu.dot_dimension_numbers<[1], [0], [0], [1], [0, 0, 1, 1], [], []>} : vector<2x9xf32>, vector<9x64xf32>, vector<2x64xf32> -> vector<2x64xf32>
    %167 = arith.addf %164, %166 : vector<2x64xf32>
    %c0_89 = arith.constant 0 : index
    %c0_90 = arith.constant 0 : index
    %168 = vector.load %arg22[%c0_89, %c0_90] : memref<1x64xf32, #tpu.memory_space<vmem>>, vector<1x64xf32>
    %169 = vector.broadcast %168 : vector<1x64xf32> to vector<2x64xf32>
    %170 = arith.addf %167, %169 : vector<2x64xf32>
    %cst_91 = arith.constant 0.000000e+00 : f32
    %171 = vector.broadcast %cst_91 : f32 to vector<2x64xf32>
    %172 = arith.maximumf %170, %171 : vector<2x64xf32>
    %c0_92 = arith.constant 0 : index
    %c0_93 = arith.constant 0 : index
    %173 = vector.load %arg23[%c0_92, %c0_93] : memref<64x4xf32, #tpu.memory_space<vmem>>, vector<64x4xf32>
    %cst_94 = arith.constant dense<0.000000e+00> : vector<2x4xf32>
    %174 = tpu.matmul %172, %173, %cst_94 {dimension_numbers = #tpu.dot_dimension_numbers<[1], [0], [0], [1], [0, 0, 1, 1], [], []>} : vector<2x64xf32>, vector<64x4xf32>, vector<2x4xf32> -> vector<2x4xf32>
    %c0_95 = arith.constant 0 : index
    %c0_96 = arith.constant 0 : index
    %175 = vector.load %arg24[%c0_95, %c0_96] : memref<1x4xf32, #tpu.memory_space<vmem>>, vector<1x4xf32>
    %176 = vector.broadcast %175 : vector<1x4xf32> to vector<2x4xf32>
    %177 = arith.addf %174, %176 : vector<2x4xf32>
    %c0_97 = arith.constant 0 : index
    %c0_98 = arith.constant 0 : index
    %178 = vector.load %arg25[%c0_97, %c0_98] : memref<2x4xf32, #tpu.memory_space<vmem>>, vector<2x4xf32>
    tpu.vector_store %arg25[%c0_97, %c0_98], %177 {strides = array<i32>} : memref<2x4xf32, #tpu.memory_space<vmem>>, vector<2x4xf32>,
    return
  }
}

</mosaic_0001>

<llo_original>
// kernel: multi_property_predictor.1
$region0: #{multi_property_predictor.1}
  #allocation0 [shape = 'u32[]', space=smem, size = 0x4, offset = 0x4, fixed_abs, tag = 'smem constant byte address 0x4 - core index']
  #allocation1 [shape = 'u32[144,128]{1,0:T(1,128)}', space=vmem, size = 0x12000, scoped, tag = 'internal scratch']
  %s0 = inlined_call_operand.hbm [shape: f32[16,9], index: 0, kind: input, shape index: {}]
  %s1 = inlined_call_operand.hbm [shape: f32[16,16], index: 1, kind: input, shape index: {}]
  %s2 = inlined_call_operand.hbm [shape: f32[2,16], index: 2, kind: input, shape index: {}]
  %s3 = inlined_call_operand.vmem [shape: f32[16,2], index: 3, kind: input, shape index: {}]
  %s4 = inlined_call_operand.hbm [shape: f32[9,64], index: 4, kind: input, shape index: {}]
  %s5 = inlined_call_operand.hbm [shape: f32[1,64], index: 5, kind: input, shape index: {}]
  %s6 = inlined_call_operand.hbm [shape: f32[1,64], index: 6, kind: input, shape index: {}]
  %s7 = inlined_call_operand.hbm [shape: f32[1,64], index: 7, kind: input, shape index: {}]
  %s8 = inlined_call_operand.vmem [shape: f32[64,64], index: 8, kind: input, shape index: {}]
  %s9 = inlined_call_operand.hbm [shape: f32[1,64], index: 9, kind: input, shape index: {}]
  %s10 = inlined_call_operand.hbm [shape: f32[1,64], index: 10, kind: input, shape index: {}]
  %s11 = inlined_call_operand.hbm [shape: f32[1,64], index: 11, kind: input, shape index: {}]
  %s12 = inlined_call_operand.vmem [shape: f32[64,64], index: 12, kind: input, shape index: {}]
  %s13 = inlined_call_operand.hbm [shape: f32[1,64], index: 13, kind: input, shape index: {}]
  %s14 = inlined_call_operand.hbm [shape: f32[1,64], index: 14, kind: input, shape index: {}]
  %s15 = inlined_call_operand.hbm [shape: f32[1,64], index: 15, kind: input, shape index: {}]
  %s16 = inlined_call_operand.hbm [shape: f32[1,64], index: 16, kind: input, shape index: {}]
  %s17 = inlined_call_operand.hbm [shape: f32[1,64], index: 17, kind: input, shape index: {}]
  %s18 = inlined_call_operand.hbm [shape: f32[1,64], index: 18, kind: input, shape index: {}]
  %s19 = inlined_call_operand.vmem [shape: f32[64,9], index: 19, kind: input, shape index: {}]
  %s20 = inlined_call_operand.vmem [shape: f32[64,64], index: 20, kind: input, shape index: {}]
  %s21 = inlined_call_operand.hbm [shape: f32[9,64], index: 21, kind: input, shape index: {}]
  %s22 = inlined_call_operand.hbm [shape: f32[1,64], index: 22, kind: input, shape index: {}]
  %s23 = inlined_call_operand.vmem [shape: f32[64,4], index: 23, kind: input, shape index: {}]
  %s24 = inlined_call_operand.hbm [shape: f32[1,4], index: 24, kind: input, shape index: {}]
  %s25 = inlined_call_operand.hbm [shape: f32[2,4], index: 25, kind: output, shape index: {}]
  %s26 = sld [smem:[#allocation0]]
  $region186: #{multi_property_predictor.1} parent=0
    _
  %s28 = ssub.s32 1, %s26
  %s29 = scalar_select 0, %s28, %s26
  $region1: #{multi_property_predictor.1} parent=0
    #allocation2 [shape = 'u8[8192]{0}', space=vmem, size = 0x2000, scoped, tag = 'input window, operand 0, single buffered']
    #allocation3 [shape = 's32[1]{0}', space=sflag, size = 0x4, scoped, tag = 'scoped memory for multi_property_predictor.1']
    #allocation4 [shape = 's32[1]{0}', space=sflag, size = 0x4, scoped, tag = 'scoped memory for multi_property_predictor.1']
    #allocation5 [shape = 'u8[8192]{0}', space=vmem, size = 0x2000, scoped, tag = 'input window, operand 1, single buffered']
    #allocation6 [shape = 's32[1]{0}', space=sflag, size = 0x4, scoped, tag = 'scoped memory for multi_property_predictor.1']
    #allocation7 [shape = 'u8[1024]{0}', space=vmem, size = 0x400, scoped, tag = 'input window, operand 2, single buffered']
    #allocation8 [shape = 'u8[8192]{0}', space=vmem, size = 0x2000, scoped, tag = 'input window, operand 4, single buffered']
    #allocation9 [shape = 's32[1]{0}', space=sflag, size = 0x4, scoped, tag = 'scoped memory for multi_property_predictor.1']
    #allocation10 [shape = 'u8[512]{0}', space=vmem, size = 0x400, scoped, tag = 'input window, operand 5, single buffered']
    #allocation11 [shape = 'u8[512]{0}', space=vmem, size = 0x400, scoped, tag = 'input window, operand 6, single buffered']
    #allocation12 [shape = 's32[1]{0}', space=sflag, size = 0x4, scoped, tag = 'scoped memory for multi_property_predictor.1']
    #allocation13 [shape = 'u8[512]{0}', space=vmem, size = 0x400, scoped, tag = 'input window, operand 7, single buffered']
    #allocation14 [shape = 'u8[512]{0}', space=vmem, size = 0x400, scoped, tag = 'input window, operand 9, single buffered']
    #allocation15 [shape = 's32[1]{0}', space=sflag, size = 0x4, scoped, tag = 'scoped memory for multi_property_predictor.1']
    #allocation16 [shape = 'u8[512]{0}', space=vmem, size = 0x400, scoped, tag = 'input window, operand 10, single buffered']
    #allocation17 [shape = 'u8[512]{0}', space=vmem, size = 0x400, scoped, tag = 'input window, operand 11, single buffered']
    #allocation18 [shape = 's32[1]{0}', space=sflag, size = 0x4, scoped, tag = 'scoped memory for multi_property_predictor.1']
    #allocation19 [shape = 'u8[512]{0}', space=vmem, size = 0x400, scoped, tag = 'input window, operand 13, single buffered']
    #allocation20 [shape = 'u8[512]{0}', space=vmem, size = 0x400, scoped, tag = 'input window, operand 14, single buffered']
    #allocation21 [shape = 's32[1]{0}', space=sflag, size = 0x4, scoped, tag = 'scoped memory for multi_property_predictor.1']
    #allocation22 [shape = 'u8[512]{0}', space=vmem, size = 0x400, scoped, tag = 'input window, operand 15, single buffered']
    #allocation23 [shape = 'u8[512]{0}', space=vmem, size = 0x400, scoped, tag = 'input window, operand 16, single buffered']
    #allocation24 [shape = 's32[1]{0}', space=sflag, size = 0x4, scoped, tag = 'scoped memory for multi_property_predictor.1']
    #allocation25 [shape = 'u8[512]{0}', space=vmem, size = 0x400, scoped, tag = 'input window, operand 17, single buffered']
    #allocation26 [shape = 'u8[512]{0}', space=vmem, size = 0x400, scoped, tag = 'input window, operand 18, single buffered']
    #allocation27 [shape = 's32[1]{0}', space=sflag, size = 0x4, scoped, tag = 'scoped memory for multi_property_predictor.1']
    #allocation28 [shape = 'u8[8192]{0}', space=vmem, size = 0x2000, scoped, tag = 'input window, operand 21, single buffered']
    #allocation29 [shape = 'u8[512]{0}', space=vmem, size = 0x400, scoped, tag = 'input window, operand 22, single buffered']
    #allocation30 [shape = 's32[1]{0}', space=sflag, size = 0x4, scoped, tag = 'scoped memory for multi_property_predictor.1']
    #allocation31 [shape = 'u8[512]{0}', space=vmem, size = 0x400, scoped, tag = 'input window, operand 24, single buffered']
    #allocation32 [shape = 'u8[1024]{0}', space=vmem, size = 0x400, scoped, tag = 'output window, operand 0, single buffered']
    %30 = vsyncpa [#allocation3], 0
    %31 = vsyncpa [#allocation6], 0
    %32 = vsyncpa [#allocation9], 0
    %33 = vsyncpa [#allocation12], 0
    %34 = vsyncpa [#allocation15], 0
    %35 = vsyncpa [#allocation18], 0
    %36 = vsyncpa [#allocation21], 0
    %37 = vsyncpa [#allocation24], 0
    %38 = vsyncpa [#allocation27], 0
    %39 = vsyncpa [#allocation30], 0
    %40 = vsyncpa [#allocation4], 0
    // Predicated region
    $region2: #{multi_property_predictor.1} parent=1 // pred_check
      _
    $region3: #{multi_property_predictor.1} parent=1 // pred_check_branch
      %42 = sbr.rel (0) target = $region5
    $region4: #{multi_property_predictor.1} parent=1 // pred_region
      %s44 = ssub.s32 256, 256
      %45 = vsyncadd [#allocation3], %s44
      %s46 = sshll.u32 [#allocation2], 4
      %s47 = int_to_ptr.vmem [resolvable:$true] %s46
      %52 = dma.hbm_to_vmem [thread:$0]  %s0, 256, %s47, [#allocation3], 128, 128, 8
    $region5: #{multi_property_predictor.1} parent=1 // pred_fallthru
      _
    // Predicated region
    $region6: #{multi_property_predictor.1} parent=1 // pred_check
      _
    $region7: #{multi_property_predictor.1} parent=1 // pred_check_branch
      %54 = sbr.rel (0) target = $region9
    $region8: #{multi_property_predictor.1} parent=1 // pred_region
      %s56 = ssub.s32 256, 256
      %57 = vsyncadd [#allocation6], %s56
      %s58 = sshll.u32 [#allocation5], 4
      %s59 = int_to_ptr.vmem [resolvable:$true] %s58
      %64 = dma.hbm_to_vmem [thread:$0]  %s1, 256, %s59, [#allocation6], 128, 128, 8
    $region9: #{multi_property_predictor.1} parent=1 // pred_fallthru
      _
    // Predicated region
    $region10: #{multi_property_predictor.1} parent=1 // pred_check
      _
    $region11: #{multi_property_predictor.1} parent=1 // pred_check_branch
      %66 = sbr.rel (0) target = $region13
    $region12: #{multi_property_predictor.1} parent=1 // pred_region
      %s68 = ssub.s32 32, 32
      %69 = vsyncadd [#allocation6], %s68
      %s71 = sshll.u32 [#allocation7], 4
      %s72 = int_to_ptr.vmem [resolvable:$true] %s71
      %74 = dma.hbm_to_vmem [thread:$0]  %s2, 32, %s72, [#allocation6]
    $region13: #{multi_property_predictor.1} parent=1 // pred_fallthru
      _
    // Predicated region
    $region14: #{multi_property_predictor.1} parent=1 // pred_check
      _
    $region15: #{multi_property_predictor.1} parent=1 // pred_check_branch
      %76 = sbr.rel (0) target = $region17
    $region16: #{multi_property_predictor.1} parent=1 // pred_region
      _
    $region17: #{multi_property_predictor.1} parent=1 // pred_fallthru
      _
    // Predicated region
    $region18: #{multi_property_predictor.1} parent=1 // pred_check
      _
    $region19: #{multi_property_predictor.1} parent=1 // pred_check_branch
      %78 = sbr.rel (0) target = $region21
    $region20: #{multi_property_predictor.1} parent=1 // pred_region
      %s80 = ssub.s32 256, 256
      %81 = vsyncadd [#allocation9], %s80
      %s82 = sshll.u32 [#allocation8], 4
      %s83 = int_to_ptr.vmem [resolvable:$true] %s82
      %88 = dma.hbm_to_vmem [thread:$0]  %s4, 256, %s83, [#allocation9], 128, 128, 8
    $region21: #{multi_property_predictor.1} parent=1 // pred_fallthru
      _
    // Predicated region
    $region22: #{multi_property_predictor.1} parent=1 // pred_check
      _
    $region23: #{multi_property_predictor.1} parent=1 // pred_check_branch
      %90 = sbr.rel (0) target = $region25
    $region24: #{multi_property_predictor.1} parent=1 // pred_region
      %s92 = ssub.s32 16, 16
      %93 = vsyncadd [#allocation9], %s92
      %s95 = sshll.u32 [#allocation10], 4
      %s96 = int_to_ptr.vmem [resolvable:$true] %s95
      %98 = dma.hbm_to_vmem [thread:$0]  %s5, 16, %s96, [#allocation9]
    $region25: #{multi_property_predictor.1} parent=1 // pred_fallthru
      _
    // Predicated region
    $region26: #{multi_property_predictor.1} parent=1 // pred_check
      _
    $region27: #{multi_property_predictor.1} parent=1 // pred_check_branch
      %100 = sbr.rel (0) target = $region29
    $region28: #{multi_property_predictor.1} parent=1 // pred_region
      %s102 = ssub.s32 16, 16
      %103 = vsyncadd [#allocation12], %s102
      %s105 = sshll.u32 [#allocation11], 4
      %s106 = int_to_ptr.vmem [resolvable:$true] %s105
      %108 = dma.hbm_to_vmem [thread:$0]  %s6, 16, %s106, [#allocation12]
    $region29: #{multi_property_predictor.1} parent=1 // pred_fallthru
      _
    // Predicated region
    $region30: #{multi_property_predictor.1} parent=1 // pred_check
      _
    $region31: #{multi_property_predictor.1} parent=1 // pred_check_branch
      %110 = sbr.rel (0) target = $region33
    $region32: #{multi_property_predictor.1} parent=1 // pred_region
      %s112 = ssub.s32 16, 16
      %113 = vsyncadd [#allocation12], %s112
      %s115 = sshll.u32 [#allocation13], 4
      %s116 = int_to_ptr.vmem [resolvable:$true] %s115
      %118 = dma.hbm_to_vmem [thread:$0]  %s7, 16, %s116, [#allocation12]
    $region33: #{multi_property_predictor.1} parent=1 // pred_fallthru
      _
    // Predicated region
    $region34: #{multi_property_predictor.1} parent=1 // pred_check
      _
    $region35: #{multi_property_predictor.1} parent=1 // pred_check_branch
      %120 = sbr.rel (0) target = $region37
    $region36: #{multi_property_predictor.1} parent=1 // pred_region
      _
    $region37: #{multi_property_predictor.1} parent=1 // pred_fallthru
      _
    // Predicated region
    $region38: #{multi_property_predictor.1} parent=1 // pred_check
      _
    $region39: #{multi_property_predictor.1} parent=1 // pred_check_branch
      %122 = sbr.rel (0) target = $region41
    $region40: #{multi_property_predictor.1} parent=1 // pred_region
      %s124 = ssub.s32 16, 16
      %125 = vsyncadd [#allocation15], %s124
      %s127 = sshll.u32 [#allocation14], 4
      %s128 = int_to_ptr.vmem [resolvable:$true] %s127
      %130 = dma.hbm_to_vmem [thread:$0]  %s9, 16, %s128, [#allocation15]
    $region41: #{multi_property_predictor.1} parent=1 // pred_fallthru
      _
    // Predicated region
    $region42: #{multi_property_predictor.1} parent=1 // pred_check
      _
    $region43: #{multi_property_predictor.1} parent=1 // pred_check_branch
      %132 = sbr.rel (0) target = $region45
    $region44: #{multi_property_predictor.1} parent=1 // pred_region
      %s134 = ssub.s32 16, 16
      %135 = vsyncadd [#allocation15], %s134
      %s137 = sshll.u32 [#allocation16], 4
      %s138 = int_to_ptr.vmem [resolvable:$true] %s137
      %140 = dma.hbm_to_vmem [thread:$0]  %s10, 16, %s138, [#allocation15]
    $region45: #{multi_property_predictor.1} parent=1 // pred_fallthru
      _
    // Predicated region
    $region46: #{multi_property_predictor.1} parent=1 // pred_check
      _
    $region47: #{multi_property_predictor.1} parent=1 // pred_check_branch
      %142 = sbr.rel (0) target = $region49
    $region48: #{multi_property_predictor.1} parent=1 // pred_region
      %s144 = ssub.s32 16, 16
      %145 = vsyncadd [#allocation18], %s144
      %s147 = sshll.u32 [#allocation17], 4
      %s148 = int_to_ptr.vmem [resolvable:$true] %s147
      %150 = dma.hbm_to_vmem [thread:$0]  %s11, 16, %s148, [#allocation18]
    $region49: #{multi_property_predictor.1} parent=1 // pred_fallthru
      _
    // Predicated region
    $region50: #{multi_property_predictor.1} parent=1 // pred_check
      _
    $region51: #{multi_property_predictor.1} parent=1 // pred_check_branch
      %152 = sbr.rel (0) target = $region53
    $region52: #{multi_property_predictor.1} parent=1 // pred_region
      _
    $region53: #{multi_property_predictor.1} parent=1 // pred_fallthru
      _
    // Predicated region
    $region54: #{multi_property_predictor.1} parent=1 // pred_check
      _
    $region55: #{multi_property_predictor.1} parent=1 // pred_check_branch
      %154 = sbr.rel (0) target = $region57
    $region56: #{multi_property_predictor.1} parent=1 // pred_region
      %s156 = ssub.s32 16, 16
      %157 = vsyncadd [#allocation18], %s156
      %s159 = sshll.u32 [#allocation19], 4
      %s160 = int_to_ptr.vmem [resolvable:$true] %s159
      %162 = dma.hbm_to_vmem [thread:$0]  %s13, 16, %s160, [#allocation18]
    $region57: #{multi_property_predictor.1} parent=1 // pred_fallthru
      _
    // Predicated region
    $region58: #{multi_property_predictor.1} parent=1 // pred_check
      _
    $region59: #{multi_property_predictor.1} parent=1 // pred_check_branch
      %164 = sbr.rel (0) target = $region61
    $region60: #{multi_property_predictor.1} parent=1 // pred_region
      %s166 = ssub.s32 16, 16
      %167 = vsyncadd [#allocation21], %s166
      %s169 = sshll.u32 [#allocation20], 4
      %s170 = int_to_ptr.vmem [resolvable:$true] %s169
      %172 = dma.hbm_to_vmem [thread:$0]  %s14, 16, %s170, [#allocation21]
    $region61: #{multi_property_predictor.1} parent=1 // pred_fallthru
      _
    // Predicated region
    $region62: #{multi_property_predictor.1} parent=1 // pred_check
      _
    $region63: #{multi_property_predictor.1} parent=1 // pred_check_branch
      %174 = sbr.rel (0) target = $region65
    $region64: #{multi_property_predictor.1} parent=1 // pred_region
      %s176 = ssub.s32 16, 16
      %177 = vsyncadd [#allocation21], %s176
      %s179 = sshll.u32 [#allocation22], 4
      %s180 = int_to_ptr.vmem [resolvable:$true] %s179
      %182 = dma.hbm_to_vmem [thread:$0]  %s15, 16, %s180, [#allocation21]
    $region65: #{multi_property_predictor.1} parent=1 // pred_fallthru
      _
    // Predicated region
    $region66: #{multi_property_predictor.1} parent=1 // pred_check
      _
    $region67: #{multi_property_predictor.1} parent=1 // pred_check_branch
      %184 = sbr.rel (0) target = $region69
    $region68: #{multi_property_predictor.1} parent=1 // pred_region
      %s186 = ssub.s32 16, 16
      %187 = vsyncadd [#allocation24], %s186
      %s189 = sshll.u32 [#allocation23], 4
      %s190 = int_to_ptr.vmem [resolvable:$true] %s189
      %192 = dma.hbm_to_vmem [thread:$0]  %s16, 16, %s190, [#allocation24]
    $region69: #{multi_property_predictor.1} parent=1 // pred_fallthru
      _
    // Predicated region
    $region70: #{multi_property_predictor.1} parent=1 // pred_check
      _
    $region71: #{multi_property_predictor.1} parent=1 // pred_check_branch
      %194 = sbr.rel (0) target = $region73
    $region72: #{multi_property_predictor.1} parent=1 // pred_region
      %s196 = ssub.s32 16, 16
      %197 = vsyncadd [#allocation24], %s196
      %s199 = sshll.u32 [#allocation25], 4
      %s200 = int_to_ptr.vmem [resolvable:$true] %s199
      %202 = dma.hbm_to_vmem [thread:$0]  %s17, 16, %s200, [#allocation24]
    $region73: #{multi_property_predictor.1} parent=1 // pred_fallthru
      _
    // Predicated region
    $region74: #{multi_property_predictor.1} parent=1 // pred_check
      _
    $region75: #{multi_property_predictor.1} parent=1 // pred_check_branch
      %204 = sbr.rel (0) target = $region77
    $region76: #{multi_property_predictor.1} parent=1 // pred_region
      %s206 = ssub.s32 16, 16
      %207 = vsyncadd [#allocation27], %s206
      %s209 = sshll.u32 [#allocation26], 4
      %s210 = int_to_ptr.vmem [resolvable:$true] %s209
      %212 = dma.hbm_to_vmem [thread:$0]  %s18, 16, %s210, [#allocation27]
    $region77: #{multi_property_predictor.1} parent=1 // pred_fallthru
      _
    // Predicated region
    $region78: #{multi_property_predictor.1} parent=1 // pred_check
      _
    $region79: #{multi_property_predictor.1} parent=1 // pred_check_branch
      %214 = sbr.rel (0) target = $region81
    $region80: #{multi_property_predictor.1} parent=1 // pred_region
      _
    $region81: #{multi_property_predictor.1} parent=1 // pred_fallthru
      _
    // Predicated region
    $region82: #{multi_property_predictor.1} parent=1 // pred_check
      _
    $region83: #{multi_property_predictor.1} parent=1 // pred_check_branch
      %216 = sbr.rel (0) target = $region85
    $region84: #{multi_property_predictor.1} parent=1 // pred_region
      _
    $region85: #{multi_property_predictor.1} parent=1 // pred_fallthru
      _
    // Predicated region
    $region86: #{multi_property_predictor.1} parent=1 // pred_check
      _
    $region87: #{multi_property_predictor.1} parent=1 // pred_check_branch
      %218 = sbr.rel (0) target = $region89
    $region88: #{multi_property_predictor.1} parent=1 // pred_region
      %s220 = ssub.s32 256, 256
      %221 = vsyncadd [#allocation27], %s220
      %s222 = sshll.u32 [#allocation28], 4
      %s223 = int_to_ptr.vmem [resolvable:$true] %s222
      %228 = dma.hbm_to_vmem [thread:$0]  %s21, 256, %s223, [#allocation27], 128, 128, 8
    $region89: #{multi_property_predictor.1} parent=1 // pred_fallthru
      _
    // Predicated region
    $region90: #{multi_property_predictor.1} parent=1 // pred_check
      _
    $region91: #{multi_property_predictor.1} parent=1 // pred_check_branch
      %230 = sbr.rel (0) target = $region93
    $region92: #{multi_property_predictor.1} parent=1 // pred_region
      %s232 = ssub.s32 16, 16
      %233 = vsyncadd [#allocation30], %s232
      %s235 = sshll.u32 [#allocation29], 4
      %s236 = int_to_ptr.vmem [resolvable:$true] %s235
      %238 = dma.hbm_to_vmem [thread:$0]  %s22, 16, %s236, [#allocation30]
    $region93: #{multi_property_predictor.1} parent=1 // pred_fallthru
      _
    // Predicated region
    $region94: #{multi_property_predictor.1} parent=1 // pred_check
      _
    $region95: #{multi_property_predictor.1} parent=1 // pred_check_branch
      %240 = sbr.rel (0) target = $region97
    $region96: #{multi_property_predictor.1} parent=1 // pred_region
      _
    $region97: #{multi_property_predictor.1} parent=1 // pred_fallthru
      _
    // Predicated region
    $region98: #{multi_property_predictor.1} parent=1 // pred_check
      _
    $region99: #{multi_property_predictor.1} parent=1 // pred_check_branch
      %242 = sbr.rel (0) target = $region101
    $region100: #{multi_property_predictor.1} parent=1 // pred_region
      %s244 = ssub.s32 16, 16
      %245 = vsyncadd [#allocation30], %s244
      %s247 = sshll.u32 [#allocation31], 4
      %s248 = int_to_ptr.vmem [resolvable:$true] %s247
      %250 = dma.hbm_to_vmem [thread:$0]  %s24, 16, %s248, [#allocation30]
    $region101: #{multi_property_predictor.1} parent=1 // pred_fallthru
      _
    // Predicated region
    $region102: #{multi_property_predictor.1} parent=1 // pred_check
      _
    $region103: #{multi_property_predictor.1} parent=1 // pred_check_branch
      %252 = sbr.rel (0) target = $region105
    $region104: #{multi_property_predictor.1} parent=1 // pred_region
      %253 = dma.done [#allocation3], 256
    $region105: #{multi_property_predictor.1} parent=1 // pred_fallthru
      _
    // Predicated region
    $region106: #{multi_property_predictor.1} parent=1 // pred_check
      _
    $region107: #{multi_property_predictor.1} parent=1 // pred_check_branch
      %255 = sbr.rel (0) target = $region109
    $region108: #{multi_property_predictor.1} parent=1 // pred_region
      %256 = dma.done [#allocation6], 256
    $region109: #{multi_property_predictor.1} parent=1 // pred_fallthru
      _
    // Predicated region
    $region110: #{multi_property_predictor.1} parent=1 // pred_check
      _
    $region111: #{multi_property_predictor.1} parent=1 // pred_check_branch
      %258 = sbr.rel (0) target = $region113
    $region112: #{multi_property_predictor.1} parent=1 // pred_region
      %259 = dma.done [#allocation6], 32
    $region113: #{multi_property_predictor.1} parent=1 // pred_fallthru
      _
    // Predicated region
    $region114: #{multi_property_predictor.1} parent=1 // pred_check
      _
    $region115: #{multi_property_predictor.1} parent=1 // pred_check_branch
      %261 = sbr.rel (0) target = $region117
    $region116: #{multi_property_predictor.1} parent=1 // pred_region
      %262 = dma.done [#allocation9], 256
    $region117: #{multi_property_predictor.1} parent=1 // pred_fallthru
      _
    // Predicated region
    $region118: #{multi_property_predictor.1} parent=1 // pred_check
      _
    $region119: #{multi_property_predictor.1} parent=1 // pred_check_branch
      %264 = sbr.rel (0) target = $region121
    $region120: #{multi_property_predictor.1} parent=1 // pred_region
      %265 = dma.done [#allocation9], 16
    $region121: #{multi_property_predictor.1} parent=1 // pred_fallthru
      _
    // Predicated region
    $region122: #{multi_property_predictor.1} parent=1 // pred_check
      _
    $region123: #{multi_property_predictor.1} parent=1 // pred_check_branch
      %267 = sbr.rel (0) target = $region125
    $region124: #{multi_property_predictor.1} parent=1 // pred_region
      %268 = dma.done [#allocation12], 16
    $region125: #{multi_property_predictor.1} parent=1 // pred_fallthru
      _
    // Predicated region
    $region126: #{multi_property_predictor.1} parent=1 // pred_check
      _
    $region127: #{multi_property_predictor.1} parent=1 // pred_check_branch
      %270 = sbr.rel (0) target = $region129
    $region128: #{multi_property_predictor.1} parent=1 // pred_region
      %271 = dma.done [#allocation12], 16
    $region129: #{multi_property_predictor.1} parent=1 // pred_fallthru
      _
    // Predicated region
    $region130: #{multi_property_predictor.1} parent=1 // pred_check
      _
    $region131: #{multi_property_predictor.1} parent=1 // pred_check_branch
      %273 = sbr.rel (0) target = $region133
    $region132: #{multi_property_predictor.1} parent=1 // pred_region
      %274 = dma.done [#allocation15], 16
    $region133: #{multi_property_predictor.1} parent=1 // pred_fallthru
      _
    // Predicated region
    $region134: #{multi_property_predictor.1} parent=1 // pred_check
      _
    $region135: #{multi_property_predictor.1} parent=1 // pred_check_branch
      %276 = sbr.rel (0) target = $region137
    $region136: #{multi_property_predictor.1} parent=1 // pred_region
      %277 = dma.done [#allocation15], 16
    $region137: #{multi_property_predictor.1} parent=1 // pred_fallthru
      _
    // Predicated region
    $region138: #{multi_property_predictor.1} parent=1 // pred_check
      _
    $region139: #{multi_property_predictor.1} parent=1 // pred_check_branch
      %279 = sbr.rel (0) target = $region141
    $region140: #{multi_property_predictor.1} parent=1 // pred_region
      %280 = dma.done [#allocation18], 16
    $region141: #{multi_property_predictor.1} parent=1 // pred_fallthru
      _
    // Predicated region
    $region142: #{multi_property_predictor.1} parent=1 // pred_check
      _
    $region143: #{multi_property_predictor.1} parent=1 // pred_check_branch
      %282 = sbr.rel (0) target = $region145
    $region144: #{multi_property_predictor.1} parent=1 // pred_region
      %283 = dma.done [#allocation18], 16
    $region145: #{multi_property_predictor.1} parent=1 // pred_fallthru
      _
    // Predicated region
    $region146: #{multi_property_predictor.1} parent=1 // pred_check
      _
    $region147: #{multi_property_predictor.1} parent=1 // pred_check_branch
      %285 = sbr.rel (0) target = $region149
    $region148: #{multi_property_predictor.1} parent=1 // pred_region
      %286 = dma.done [#allocation21], 16
    $region149: #{multi_property_predictor.1} parent=1 // pred_fallthru
      _
    // Predicated region
    $region150: #{multi_property_predictor.1} parent=1 // pred_check
      _
    $region151: #{multi_property_predictor.1} parent=1 // pred_check_branch
      %288 = sbr.rel (0) target = $region153
    $region152: #{multi_property_predictor.1} parent=1 // pred_region
      %289 = dma.done [#allocation21], 16
    $region153: #{multi_property_predictor.1} parent=1 // pred_fallthru
      _
    // Predicated region
    $region154: #{multi_property_predictor.1} parent=1 // pred_check
      _
    $region155: #{multi_property_predictor.1} parent=1 // pred_check_branch
      %291 = sbr.rel (0) target = $region157
    $region156: #{multi_property_predictor.1} parent=1 // pred_region
      %292 = dma.done [#allocation24], 16
    $region157: #{multi_property_predictor.1} parent=1 // pred_fallthru
      _
    // Predicated region
    $region158: #{multi_property_predictor.1} parent=1 // pred_check
      _
    $region159: #{multi_property_predictor.1} parent=1 // pred_check_branch
      %294 = sbr.rel (0) target = $region161
    $region160: #{multi_property_predictor.1} parent=1 // pred_region
      %295 = dma.done [#allocation24], 16
    $region161: #{multi_property_predictor.1} parent=1 // pred_fallthru
      _
    // Predicated region
    $region162: #{multi_property_predictor.1} parent=1 // pred_check
      _
    $region163: #{multi_property_predictor.1} parent=1 // pred_check_branch
      %297 = sbr.rel (0) target = $region165
    $region164: #{multi_property_predictor.1} parent=1 // pred_region
      %298 = dma.done [#allocation27], 16
    $region165: #{multi_property_predictor.1} parent=1 // pred_fallthru
      _
    // Predicated region
    $region166: #{multi_property_predictor.1} parent=1 // pred_check
      _
    $region167: #{multi_property_predictor.1} parent=1 // pred_check_branch
      %300 = sbr.rel (0) target = $region169
    $region168: #{multi_property_predictor.1} parent=1 // pred_region
      %301 = dma.done [#allocation27], 256
    $region169: #{multi_property_predictor.1} parent=1 // pred_fallthru
      _
    // Predicated region
    $region170: #{multi_property_predictor.1} parent=1 // pred_check
      _
    $region171: #{multi_property_predictor.1} parent=1 // pred_check_branch
      %303 = sbr.rel (0) target = $region173
    $region172: #{multi_property_predictor.1} parent=1 // pred_region
      %304 = dma.done [#allocation30], 16
    $region173: #{multi_property_predictor.1} parent=1 // pred_fallthru
      _
    // Predicated region
    $region174: #{multi_property_predictor.1} parent=1 // pred_check
      _
    $region175: #{multi_property_predictor.1} parent=1 // pred_check_branch
      %306 = sbr.rel (0) target = $region177
    $region176: #{multi_property_predictor.1} parent=1 // pred_region
      %307 = dma.done [#allocation30], 16
    $region177: #{multi_property_predictor.1} parent=1 // pred_fallthru
      _
    %v308 = vld [vmem:[#allocation5] sm:$0xff]
    %v309 = vld [vmem:[#allocation5 + $0x8] sm:$0xff]
    %vm310 = vcmp.gt.f32.partialorder %v308, 0.0
    %vm311 = vcmp.gt.f32.partialorder %v309, 0.0
    %v312 = vld [vmem:[#allocation7] sm:$0x3]
    %v313 = vld [vmem:[%s3] sm:$0xff]
    %v314 = vld [vmem:[%s3 + $0x8] sm:$0xff]
    %vm315 = vcmask 123904
    %v316 = vsel %vm315, %v312, 0.0
    %317 = vadd.xlane.f32.xlu0 %v316
    %v318 = vpop.xlane.xlu0 %317
    %v319 = vrcp.pop %v318
    %v320 = vld [vmem:[#allocation2] sm:$0xff]
    %v321 = vld [vmem:[#allocation2 + $0x8] sm:$0xff]
    %v322 = vld [vmem:[#allocation8] sm:$0xff]
    %v323 = vld [vmem:[#allocation8 + $0x8] sm:$0x1]
    %vm324 = vcmask 72704
    %v326 = vsel %vm324, %v320, 0
    %v329 = vsel %vm324, %v321, 0
    %vm331 = vcmask 1040384
    %v333 = vsel %vm331, %v323, 0
    %335 = vmatprep.subr.mxu0 0.0
    %336 = vmatpush1.msra.mxu0 0.0
    %337 = vmatprep.subr.mxu0 0.0
    %338 = vmatpush1.msra.mxu0 0.0
    %339 = vmatprep.subr.mxu0 0.0
    %340 = vmatpush1.msra.mxu0 0.0
    %341 = vmatprep.subr.mxu0 0.0
    %342 = vmatpush1.msra.mxu0 0.0
    %343 = vmatprep.subr.mxu0 0.0
    %344 = vmatpush1.msra.mxu0 0.0
    %345 = vmatprep.subr.mxu0 0.0
    %346 = vmatpush1.msra.mxu0 0.0
    %347 = vmatprep.subr.mxu0 0.0
    %348 = vmatpush1.msra.mxu0 0.0
    %349 = vmatprep.subr.mxu0 0.0
    %350 = vmatpush1.msra.mxu0 0.0
    %351 = vmatprep.subr.mxu0 0.0
    %352 = vmatpush1.msra.mxu0 0.0
    %353 = vmatprep.subr.mxu0 0.0
    %354 = vmatpush1.msra.mxu0 0.0
    %355 = vmatprep.subr.mxu0 0.0
    %356 = vmatpush1.msra.mxu0 0.0
    %357 = vmatprep.subr.mxu0 0.0
    %358 = vmatpush1.msra.mxu0 0.0
    %359 = vmatprep.subr.mxu0 0.0
    %360 = vmatpush1.msra.mxu0 0.0
    %361 = vmatprep.subr.mxu0 0.0
    %362 = vmatpush1.msra.mxu0 0.0
    %363 = vmatprep.subr.mxu0 0.0
    %364 = vmatpush1.msra.mxu0 %v333
    %365 = vmatprep.subr.mxu0 0.0
    %366 = vmatpush1.msra.mxu0 %v322
    %367 = vmatprep.subr.mxu0 0.0
    %368 = vmatpush2.msra.mxu0 0.0
    %369 = vmatprep.subr.mxu0 0.0
    %370 = vmatpush2.msra.mxu0 0.0
    %371 = vmatprep.subr.mxu0 0.0
    %372 = vmatpush2.msra.mxu0 0.0
    %373 = vmatprep.subr.mxu0 0.0
    %374 = vmatpush2.msra.mxu0 0.0
    %375 = vmatprep.subr.mxu0 0.0
    %376 = vmatpush2.msra.mxu0 0.0
    %377 = vmatprep.subr.mxu0 0.0
    %378 = vmatpush2.msra.mxu0 0.0
    %379 = vmatprep.subr.mxu0 0.0
    %380 = vmatpush2.msra.mxu0 0.0
    %381 = vmatprep.subr.mxu0 0.0
    %382 = vmatpush2.msra.mxu0 0.0
    %383 = vmatprep.subr.mxu0 0.0
    %384 = vmatpush2.msra.mxu0 0.0
    %385 = vmatprep.subr.mxu0 0.0
    %386 = vmatpush2.msra.mxu0 0.0
    %387 = vmatprep.subr.mxu0 0.0
    %388 = vmatpush2.msra.mxu0 0.0
    %389 = vmatprep.subr.mxu0 0.0
    %390 = vmatpush2.msra.mxu0 0.0
    %391 = vmatprep.subr.mxu0 0.0
    %392 = vmatpush2.msra.mxu0 0.0
    %393 = vmatprep.subr.mxu0 0.0
    %394 = vmatpush2.msra.mxu0 0.0
    %395 = vmatprep.subr.mxu0 0.0
    %396 = vmatpush2.msra.mxu0 0.0
    %397 = vmatprep.subr.mxu0 0.0
    %398 = vmatpush2.msra.mxu0 0.0
    %399 = vmatprep.mubr.f32.mxu0 0.0
    %400 = vmatmul.mubr.f32.gmra.mxu0 %v326
    %v401 = vpop.f32.mrf.mxu0
    %v402 = vadd.f32 0.0, %v401
    %v403 = vpop.f32.mrf.mxu0
    %404 = vmatprep.mubr.f32.mxu0 0.0
    %405 = vmatmul.mubr.f32.gmra.mxu0 %v329
    %v406 = vpop.f32.mrf.mxu0
    %v407 = vadd.f32 0.0, %v406
    %v408 = vpop.f32.mrf.mxu0
    %409 = vdwg.mxu0
    %v410 = vld [vmem:[#allocation11] sm:$0x1]
    %v412 = vlaneseq
    %v413 = vshrl.u32 %v412, 7
    %v414 = vsub.s32 0, %v413
    %v415 = vrot.slane %v410, %v414
    %v417 = vmul.f32 %v402, %v415
    %v418 = vmul.f32 %v407, %v415
    %vm419 = vcmask 523264
    %v420 = vsel %vm419, %v417, 0.0
    %421 = vadd.xlane.f32.xlu0 %v420
    %v422 = vpop.xlane.xlu0 %421
    %v423 = vsel %vm419, %v418, 0.0
    %424 = vadd.xlane.f32.xlu0 %v423
    %v425 = vpop.xlane.xlu0 %424
    %v426 = vld [vmem:[#allocation10] sm:$0x1]
    %v428 = vsel %vm419, %v426, 0
    %v431 = vsel %vm419, %v402, 0
    %v434 = vsel %vm419, %v407, 0
    %436 = vmatprep.subr.mxu0 0.0
    %437 = vmatpush1.xpose.msra.mxu0 0.0
    %438 = vmatprep.subr.mxu0 0.0
    %439 = vmatpush1.xpose.msra.mxu0 0.0
    %440 = vmatprep.subr.mxu0 0.0
    %441 = vmatpush1.xpose.msra.mxu0 0.0
    %442 = vmatprep.subr.mxu0 0.0
    %443 = vmatpush1.xpose.msra.mxu0 0.0
    %444 = vmatprep.subr.mxu0 0.0
    %445 = vmatpush1.xpose.msra.mxu0 0.0
    %446 = vmatprep.subr.mxu0 0.0
    %447 = vmatpush1.xpose.msra.mxu0 0.0
    %448 = vmatprep.subr.mxu0 0.0
    %449 = vmatpush1.xpose.msra.mxu0 0.0
    %450 = vmatprep.subr.mxu0 0.0
    %451 = vmatpush1.xpose.msra.mxu0 0.0
    %452 = vmatprep.subr.mxu0 0.0
    %453 = vmatpush1.xpose.msra.mxu0 0.0
    %454 = vmatprep.subr.mxu0 0.0
    %455 = vmatpush1.xpose.msra.mxu0 0.0
    %456 = vmatprep.subr.mxu0 0.0
    %457 = vmatpush1.xpose.msra.mxu0 0.0
    %458 = vmatprep.subr.mxu0 0.0
    %459 = vmatpush1.xpose.msra.mxu0 0.0
    %460 = vmatprep.subr.mxu0 0.0
    %461 = vmatpush1.xpose.msra.mxu0 0.0
    %462 = vmatprep.subr.mxu0 0.0
    %463 = vmatpush1.xpose.msra.mxu0 0.0
    %464 = vmatprep.subr.mxu0 0.0
    %465 = vmatpush1.xpose.msra.mxu0 %v434
    %466 = vmatprep.subr.mxu0 0.0
    %467 = vmatpush1.xpose.msra.mxu0 %v431
    %468 = vmatprep.subr.mxu0 0.0
    %469 = vmatpush2.xpose.msra.mxu0 0.0
    %470 = vmatprep.subr.mxu0 0.0
    %471 = vmatpush2.xpose.msra.mxu0 0.0
    %472 = vmatprep.subr.mxu0 0.0
    %473 = vmatpush2.xpose.msra.mxu0 0.0
    %474 = vmatprep.subr.mxu0 0.0
    %475 = vmatpush2.xpose.msra.mxu0 0.0
    %476 = vmatprep.subr.mxu0 0.0
    %477 = vmatpush2.xpose.msra.mxu0 0.0
    %478 = vmatprep.subr.mxu0 0.0
    %479 = vmatpush2.xpose.msra.mxu0 0.0
    %480 = vmatprep.subr.mxu0 0.0
    %481 = vmatpush2.xpose.msra.mxu0 0.0
    %482 = vmatprep.subr.mxu0 0.0
    %483 = vmatpush2.xpose.msra.mxu0 0.0
    %484 = vmatprep.subr.mxu0 0.0
    %485 = vmatpush2.xpose.msra.mxu0 0.0
    %486 = vmatprep.subr.mxu0 0.0
    %487 = vmatpush2.xpose.msra.mxu0 0.0
    %488 = vmatprep.subr.mxu0 0.0
    %489 = vmatpush2.xpose.msra.mxu0 0.0
    %490 = vmatprep.subr.mxu0 0.0
    %491 = vmatpush2.xpose.msra.mxu0 0.0
    %492 = vmatprep.subr.mxu0 0.0
    %493 = vmatpush2.xpose.msra.mxu0 0.0
    %494 = vmatprep.subr.mxu0 0.0
    %495 = vmatpush2.xpose.msra.mxu0 0.0
    %496 = vmatprep.subr.mxu0 0.0
    %497 = vmatpush2.xpose.msra.mxu0 0.0
    %498 = vmatprep.subr.mxu0 0.0
    %499 = vmatpush2.xpose.msra.mxu0 0.0
    %500 = vmatprep.mubr.f32.mxu0 0.0
    %501 = vmatmul.mubr.f32.gmra.mxu0 %v428
    %v502 = vpop.f32.mrf.mxu0
    %v503 = vadd.f32 0.0, %v502
    %v504 = vpop.f32.mrf.mxu0
    %505 = vdwg.mxu0
    %v506 = vlaneseq
    %v507 = vshrl.u32 %v506, 7
    %v508 = vsub.s32 0, %v507
    %v509 = vrot.slane %v503, %v508
    %v510 = vadd.f32 %v422, %v509
    %v511 = vadd.f32 %v425, %v509
    %vm512 = vcmp.gt.f32.partialorder %v510, 0.0
    %vm513 = vcmp.gt.f32.partialorder %v511, 0.0
    %v514 = vmul.f32 %v510, 0.2
    %v515 = vmul.f32 %v511, 0.2
    %v516 = vsel %vm512, %v510, %v514
    %v517 = vsel %vm513, %v511, %v515
    %v518 = vsel %vm310, %v516, -1e+30
    %v519 = vsel %vm311, %v517, -1e+30
    %vm520 = vcmask 130048
    %v521 = vsel %vm520, %v518, -inf
    %522 = vmax.xlane.f32.xlu0 %v521
    %v523 = vpop.xlane.xlu0 %522
    %v524 = vsel %vm520, %v519, -inf
    %525 = vmax.xlane.f32.xlu0 %v524
    %v526 = vpop.xlane.xlu0 %525
    %v527 = vsub.f32 %v518, %v523
    %v528 = vsub.f32 %v519, %v526
    %v529 = vmul.f32 %v527, 1.442695
    %v530 = vpow.pop %v529
    %v531 = vmul.f32 %v528, 1.442695
    %v532 = vpow.pop %v531
    %v533 = vsel %vm520, %v530, 0.0
    %534 = vadd.xlane.f32.xlu0 %v533
    %v535 = vpop.xlane.xlu0 %534
    %v536 = vsel %vm520, %v532, 0.0
    %537 = vadd.xlane.f32.xlu0 %v536
    %v538 = vpop.xlane.xlu0 %537
    %v539 = vrcp.pop %v535
    %v540 = vrcp.pop %v538
    %v541 = vmul.f32 %v530, %v539
    %v542 = vmul.f32 %v532, %v540
    %v543 = vld [vmem:[#allocation13] sm:$0x1]
    %v545 = vlaneseq
    %v546 = vshrl.u32 %v545, 7
    %v547 = vsub.s32 0, %v546
    %v548 = vrot.slane %v543, %v547
    %v551 = vsel %vm520, %v541, 0
    %v554 = vsel %vm520, %v542, 0
    %556 = vmatprep.subr.mxu0 0.0
    %557 = vmatpush1.msra.mxu0 0.0
    %558 = vmatprep.subr.mxu0 0.0
    %559 = vmatpush1.msra.mxu0 0.0
    %560 = vmatprep.subr.mxu0 0.0
    %561 = vmatpush1.msra.mxu0 0.0
    %562 = vmatprep.subr.mxu0 0.0
    %563 = vmatpush1.msra.mxu0 0.0
    %564 = vmatprep.subr.mxu0 0.0
    %565 = vmatpush1.msra.mxu0 0.0
    %566 = vmatprep.subr.mxu0 0.0
    %567 = vmatpush1.msra.mxu0 0.0
    %568 = vmatprep.subr.mxu0 0.0
    %569 = vmatpush1.msra.mxu0 0.0
    %570 = vmatprep.subr.mxu0 0.0
    %571 = vmatpush1.msra.mxu0 0.0
    %572 = vmatprep.subr.mxu0 0.0
    %573 = vmatpush1.msra.mxu0 0.0
    %574 = vmatprep.subr.mxu0 0.0
    %575 = vmatpush1.msra.mxu0 0.0
    %576 = vmatprep.subr.mxu0 0.0
    %577 = vmatpush1.msra.mxu0 0.0
    %578 = vmatprep.subr.mxu0 0.0
    %579 = vmatpush1.msra.mxu0 0.0
    %580 = vmatprep.subr.mxu0 0.0
    %581 = vmatpush1.msra.mxu0 0.0
    %582 = vmatprep.subr.mxu0 0.0
    %583 = vmatpush1.msra.mxu0 0.0
    %584 = vmatprep.subr.mxu0 0.0
    %585 = vmatpush1.msra.mxu0 %v407
    %586 = vmatprep.subr.mxu0 0.0
    %587 = vmatpush1.msra.mxu0 %v402
    %588 = vmatprep.subr.mxu0 0.0
    %589 = vmatpush2.msra.mxu0 0.0
    %590 = vmatprep.subr.mxu0 0.0
    %591 = vmatpush2.msra.mxu0 0.0
    %592 = vmatprep.subr.mxu0 0.0
    %593 = vmatpush2.msra.mxu0 0.0
    %594 = vmatprep.subr.mxu0 0.0
    %595 = vmatpush2.msra.mxu0 0.0
    %596 = vmatprep.subr.mxu0 0.0
    %597 = vmatpush2.msra.mxu0 0.0
    %598 = vmatprep.subr.mxu0 0.0
    %599 = vmatpush2.msra.mxu0 0.0
    %600 = vmatprep.subr.mxu0 0.0
    %601 = vmatpush2.msra.mxu0 0.0
    %602 = vmatprep.subr.mxu0 0.0
    %603 = vmatpush2.msra.mxu0 0.0
    %604 = vmatprep.subr.mxu0 0.0
    %605 = vmatpush2.msra.mxu0 0.0
    %606 = vmatprep.subr.mxu0 0.0
    %607 = vmatpush2.msra.mxu0 0.0
    %608 = vmatprep.subr.mxu0 0.0
    %609 = vmatpush2.msra.mxu0 0.0
    %610 = vmatprep.subr.mxu0 0.0
    %611 = vmatpush2.msra.mxu0 0.0
    %612 = vmatprep.subr.mxu0 0.0
    %613 = vmatpush2.msra.mxu0 0.0
    %614 = vmatprep.subr.mxu0 0.0
    %615 = vmatpush2.msra.mxu0 0.0
    %616 = vmatprep.subr.mxu0 0.0
    %617 = vmatpush2.msra.mxu0 0.0
    %618 = vmatprep.subr.mxu0 0.0
    %619 = vmatpush2.msra.mxu0 0.0
    %620 = vmatprep.mubr.f32.mxu0 0.0
    %621 = vmatmul.mubr.f32.gmra.mxu0 %v551
    %v622 = vpop.f32.mrf.mxu0
    %v623 = vadd.f32 %v548, %v622
    %v624 = vpop.f32.mrf.mxu0
    %625 = vmatprep.mubr.f32.mxu0 0.0
    %626 = vmatmul.mubr.f32.gmra.mxu0 %v554
    %v627 = vpop.f32.mrf.mxu0
    %v628 = vadd.f32 %v548, %v627
    %v629 = vpop.f32.mrf.mxu0
    %630 = vdwg.mxu0
    %vm631 = vcmp.gt.f32.partialorder %v623, 0.0
    %vm632 = vcmp.gt.f32.partialorder %v628, 0.0
    %v633 = vmul.f32 %v623, 0.01
    %v634 = vmul.f32 %v628, 0.01
    %v635 = vsel %vm631, %v623, %v633
    %v636 = vsel %vm632, %v628, %v634
    %v638 = vsel %vm520, %v312, 0
    %640 = vmatprep.subr.mxu0 0.0
    %641 = vmatpush1.msra.mxu0 0.0
    %642 = vmatprep.subr.mxu0 0.0
    %643 = vmatpush1.msra.mxu0 0.0
    %644 = vmatprep.subr.mxu0 0.0
    %645 = vmatpush1.msra.mxu0 0.0
    %646 = vmatprep.subr.mxu0 0.0
    %647 = vmatpush1.msra.mxu0 0.0
    %648 = vmatprep.subr.mxu0 0.0
    %649 = vmatpush1.msra.mxu0 0.0
    %650 = vmatprep.subr.mxu0 0.0
    %651 = vmatpush1.msra.mxu0 0.0
    %652 = vmatprep.subr.mxu0 0.0
    %653 = vmatpush1.msra.mxu0 0.0
    %654 = vmatprep.subr.mxu0 0.0
    %655 = vmatpush1.msra.mxu0 0.0
    %656 = vmatprep.subr.mxu0 0.0
    %657 = vmatpush1.msra.mxu0 0.0
    %658 = vmatprep.subr.mxu0 0.0
    %659 = vmatpush1.msra.mxu0 0.0
    %660 = vmatprep.subr.mxu0 0.0
    %661 = vmatpush1.msra.mxu0 0.0
    %662 = vmatprep.subr.mxu0 0.0
    %663 = vmatpush1.msra.mxu0 0.0
    %664 = vmatprep.subr.mxu0 0.0
    %665 = vmatpush1.msra.mxu0 0.0
    %666 = vmatprep.subr.mxu0 0.0
    %667 = vmatpush1.msra.mxu0 0.0
    %668 = vmatprep.subr.mxu0 0.0
    %669 = vmatpush1.msra.mxu0 %v636
    %670 = vmatprep.subr.mxu0 0.0
    %671 = vmatpush1.msra.mxu0 %v635
    %672 = vmatprep.subr.mxu0 0.0
    %673 = vmatpush2.msra.mxu0 0.0
    %674 = vmatprep.subr.mxu0 0.0
    %675 = vmatpush2.msra.mxu0 0.0
    %676 = vmatprep.subr.mxu0 0.0
    %677 = vmatpush2.msra.mxu0 0.0
    %678 = vmatprep.subr.mxu0 0.0
    %679 = vmatpush2.msra.mxu0 0.0
    %680 = vmatprep.subr.mxu0 0.0
    %681 = vmatpush2.msra.mxu0 0.0
    %682 = vmatprep.subr.mxu0 0.0
    %683 = vmatpush2.msra.mxu0 0.0
    %684 = vmatprep.subr.mxu0 0.0
    %685 = vmatpush2.msra.mxu0 0.0
    %686 = vmatprep.subr.mxu0 0.0
    %687 = vmatpush2.msra.mxu0 0.0
    %688 = vmatprep.subr.mxu0 0.0
    %689 = vmatpush2.msra.mxu0 0.0
    %690 = vmatprep.subr.mxu0 0.0
    %691 = vmatpush2.msra.mxu0 0.0
    %692 = vmatprep.subr.mxu0 0.0
    %693 = vmatpush2.msra.mxu0 0.0
    %694 = vmatprep.subr.mxu0 0.0
    %695 = vmatpush2.msra.mxu0 0.0
    %696 = vmatprep.subr.mxu0 0.0
    %697 = vmatpush2.msra.mxu0 0.0
    %698 = vmatprep.subr.mxu0 0.0
    %699 = vmatpush2.msra.mxu0 0.0
    %700 = vmatprep.subr.mxu0 0.0
    %701 = vmatpush2.msra.mxu0 0.0
    %702 = vmatprep.subr.mxu0 0.0
    %703 = vmatpush2.msra.mxu0 0.0
    %704 = vmatprep.mubr.f32.mxu0 0.0
    %705 = vmatmul.mubr.f32.gmra.mxu0 %v638
    %v706 = vpop.f32.mrf.mxu0
    %v707 = vadd.f32 0.0, %v706
    %v708 = vpop.f32.mrf.mxu0
    %709 = vdwg.mxu0
    %v710 = vmul.f32 %v707, %v319
    %v711 = vld [vmem:[#allocation26] sm:$0x1]
    %vm712 = vcmask 15360
    %v714 = vsel %vm712, %v313, 0
    %v717 = vsel %vm712, %v314, 0
    %vm719 = vcmask 1041408
    %v721 = vsel %vm719, %v710, 0
    %723 = vmatprep.subr.mxu0 0.0
    %724 = vmatpush1.msra.mxu0 0.0
    %725 = vmatprep.subr.mxu0 0.0
    %726 = vmatpush1.msra.mxu0 0.0
    %727 = vmatprep.subr.mxu0 0.0
    %728 = vmatpush1.msra.mxu0 0.0
    %729 = vmatprep.subr.mxu0 0.0
    %730 = vmatpush1.msra.mxu0 0.0
    %731 = vmatprep.subr.mxu0 0.0
    %732 = vmatpush1.msra.mxu0 0.0
    %733 = vmatprep.subr.mxu0 0.0
    %734 = vmatpush1.msra.mxu0 0.0
    %735 = vmatprep.subr.mxu0 0.0
    %736 = vmatpush1.msra.mxu0 0.0
    %737 = vmatprep.subr.mxu0 0.0
    %738 = vmatpush1.msra.mxu0 0.0
    %739 = vmatprep.subr.mxu0 0.0
    %740 = vmatpush1.msra.mxu0 0.0
    %741 = vmatprep.subr.mxu0 0.0
    %742 = vmatpush1.msra.mxu0 0.0
    %743 = vmatprep.subr.mxu0 0.0
    %744 = vmatpush1.msra.mxu0 0.0
    %745 = vmatprep.subr.mxu0 0.0
    %746 = vmatpush1.msra.mxu0 0.0
    %747 = vmatprep.subr.mxu0 0.0
    %748 = vmatpush1.msra.mxu0 0.0
    %749 = vmatprep.subr.mxu0 0.0
    %750 = vmatpush1.msra.mxu0 0.0
    %751 = vmatprep.subr.mxu0 0.0
    %752 = vmatpush1.msra.mxu0 0.0
    %753 = vmatprep.subr.mxu0 0.0
    %754 = vmatpush1.msra.mxu0 %v721
    %755 = vmatprep.subr.mxu0 0.0
    %756 = vmatpush2.msra.mxu0 0.0
    %757 = vmatprep.subr.mxu0 0.0
    %758 = vmatpush2.msra.mxu0 0.0
    %759 = vmatprep.subr.mxu0 0.0
    %760 = vmatpush2.msra.mxu0 0.0
    %761 = vmatprep.subr.mxu0 0.0
    %762 = vmatpush2.msra.mxu0 0.0
    %763 = vmatprep.subr.mxu0 0.0
    %764 = vmatpush2.msra.mxu0 0.0
    %765 = vmatprep.subr.mxu0 0.0
    %766 = vmatpush2.msra.mxu0 0.0
    %767 = vmatprep.subr.mxu0 0.0
    %768 = vmatpush2.msra.mxu0 0.0
    %769 = vmatprep.subr.mxu0 0.0
    %770 = vmatpush2.msra.mxu0 0.0
    %771 = vmatprep.subr.mxu0 0.0
    %772 = vmatpush2.msra.mxu0 0.0
    %773 = vmatprep.subr.mxu0 0.0
    %774 = vmatpush2.msra.mxu0 0.0
    %775 = vmatprep.subr.mxu0 0.0
    %776 = vmatpush2.msra.mxu0 0.0
    %777 = vmatprep.subr.mxu0 0.0
    %778 = vmatpush2.msra.mxu0 0.0
    %779 = vmatprep.subr.mxu0 0.0
    %780 = vmatpush2.msra.mxu0 0.0
    %781 = vmatprep.subr.mxu0 0.0
    %782 = vmatpush2.msra.mxu0 0.0
    %783 = vmatprep.subr.mxu0 0.0
    %784 = vmatpush2.msra.mxu0 0.0
    %785 = vmatprep.subr.mxu0 0.0
    %786 = vmatpush2.msra.mxu0 0.0
    %787 = vmatprep.mubr.f32.mxu0 0.0
    %788 = vmatmul.mubr.f32.gmra.mxu0 %v714
    %v789 = vpop.f32.mrf.mxu0
    %v790 = vadd.f32 0.0, %v789
    %v791 = vpop.f32.mrf.mxu0
    %792 = vmatprep.mubr.f32.mxu0 0.0
    %793 = vmatmul.mubr.f32.gmra.mxu0 %v717
    %v794 = vpop.f32.mrf.mxu0
    %v795 = vadd.f32 0.0, %v794
    %v796 = vpop.f32.mrf.mxu0
    %797 = vdwg.mxu0
    %v799 = vlaneseq
    %v800 = vshrl.u32 %v799, 7
    %v801 = vsub.s32 0, %v800
    %v802 = vrot.slane %v711, %v801
    %v804 = vmul.f32 %v802, %v790
    %v805 = vmul.f32 %v802, %v795
    %v806 = vsub.f32 %v635, %v804
    %v807 = vsub.f32 %v636, %v805
    %v808 = vmul.f32 %v806, %v806
    %v809 = vmul.f32 %v807, %v807
    %810 = vmatprep.subr.mxu0 0.0
    %811 = vmatpush1.msra.mxu0 0.0
    %812 = vmatprep.subr.mxu0 0.0
    %813 = vmatpush1.msra.mxu0 0.0
    %814 = vmatprep.subr.mxu0 0.0
    %815 = vmatpush1.msra.mxu0 0.0
    %816 = vmatprep.subr.mxu0 0.0
    %817 = vmatpush1.msra.mxu0 0.0
    %818 = vmatprep.subr.mxu0 0.0
    %819 = vmatpush1.msra.mxu0 0.0
    %820 = vmatprep.subr.mxu0 0.0
    %821 = vmatpush1.msra.mxu0 0.0
    %822 = vmatprep.subr.mxu0 0.0
    %823 = vmatpush1.msra.mxu0 0.0
    %824 = vmatprep.subr.mxu0 0.0
    %825 = vmatpush1.msra.mxu0 0.0
    %826 = vmatprep.subr.mxu0 0.0
    %827 = vmatpush1.msra.mxu0 0.0
    %828 = vmatprep.subr.mxu0 0.0
    %829 = vmatpush1.msra.mxu0 0.0
    %830 = vmatprep.subr.mxu0 0.0
    %831 = vmatpush1.msra.mxu0 0.0
    %832 = vmatprep.subr.mxu0 0.0
    %833 = vmatpush1.msra.mxu0 0.0
    %834 = vmatprep.subr.mxu0 0.0
    %835 = vmatpush1.msra.mxu0 0.0
    %836 = vmatprep.subr.mxu0 0.0
    %837 = vmatpush1.msra.mxu0 0.0
    %838 = vmatprep.subr.mxu0 0.0
    %839 = vmatpush1.msra.mxu0 %v809
    %840 = vmatprep.subr.mxu0 0.0
    %841 = vmatpush1.msra.mxu0 %v808
    %842 = vmatprep.subr.mxu0 0.0
    %843 = vmatpush2.msra.mxu0 0.0
    %844 = vmatprep.subr.mxu0 0.0
    %845 = vmatpush2.msra.mxu0 0.0
    %846 = vmatprep.subr.mxu0 0.0
    %847 = vmatpush2.msra.mxu0 0.0
    %848 = vmatprep.subr.mxu0 0.0
    %849 = vmatpush2.msra.mxu0 0.0
    %850 = vmatprep.subr.mxu0 0.0
    %851 = vmatpush2.msra.mxu0 0.0
    %852 = vmatprep.subr.mxu0 0.0
    %853 = vmatpush2.msra.mxu0 0.0
    %854 = vmatprep.subr.mxu0 0.0
    %855 = vmatpush2.msra.mxu0 0.0
    %856 = vmatprep.subr.mxu0 0.0
    %857 = vmatpush2.msra.mxu0 0.0
    %858 = vmatprep.subr.mxu0 0.0
    %859 = vmatpush2.msra.mxu0 0.0
    %860 = vmatprep.subr.mxu0 0.0
    %861 = vmatpush2.msra.mxu0 0.0
    %862 = vmatprep.subr.mxu0 0.0
    %863 = vmatpush2.msra.mxu0 0.0
    %864 = vmatprep.subr.mxu0 0.0
    %865 = vmatpush2.msra.mxu0 0.0
    %866 = vmatprep.subr.mxu0 0.0
    %867 = vmatpush2.msra.mxu0 0.0
    %868 = vmatprep.subr.mxu0 0.0
    %869 = vmatpush2.msra.mxu0 0.0
    %870 = vmatprep.subr.mxu0 0.0
    %871 = vmatpush2.msra.mxu0 0.0
    %872 = vmatprep.subr.mxu0 0.0
    %873 = vmatpush2.msra.mxu0 0.0
    %874 = vmatprep.mubr.f32.mxu0 0.0
    %875 = vmatmul.mubr.f32.gmra.mxu0 %v638
    %v876 = vpop.f32.mrf.mxu0
    %v877 = vadd.f32 0.0, %v876
    %v878 = vpop.f32.mrf.mxu0
    %879 = vdwg.mxu0
    %v880 = vmul.f32 %v877, %v319
    %v881 = vld [vmem:[#allocation23] sm:$0x1]
    %v883 = vlaneseq
    %v884 = vshrl.u32 %v883, 7
    %v885 = vsub.s32 0, %v884
    %v886 = vrot.slane %v881, %v885
    %v888 = vmul.f32 %v886, %v806
    %v889 = vmul.f32 %v886, %v807
    %v891 = vsel %vm719, %v880, 0
    %893 = vmatprep.subr.mxu0 0.0
    %894 = vmatpush1.msra.mxu0 0.0
    %895 = vmatprep.subr.mxu0 0.0
    %896 = vmatpush1.msra.mxu0 0.0
    %897 = vmatprep.subr.mxu0 0.0
    %898 = vmatpush1.msra.mxu0 0.0
    %899 = vmatprep.subr.mxu0 0.0
    %900 = vmatpush1.msra.mxu0 0.0
    %901 = vmatprep.subr.mxu0 0.0
    %902 = vmatpush1.msra.mxu0 0.0
    %903 = vmatprep.subr.mxu0 0.0
    %904 = vmatpush1.msra.mxu0 0.0
    %905 = vmatprep.subr.mxu0 0.0
    %906 = vmatpush1.msra.mxu0 0.0
    %907 = vmatprep.subr.mxu0 0.0
    %908 = vmatpush1.msra.mxu0 0.0
    %909 = vmatprep.subr.mxu0 0.0
    %910 = vmatpush1.msra.mxu0 0.0
    %911 = vmatprep.subr.mxu0 0.0
    %912 = vmatpush1.msra.mxu0 0.0
    %913 = vmatprep.subr.mxu0 0.0
    %914 = vmatpush1.msra.mxu0 0.0
    %915 = vmatprep.subr.mxu0 0.0
    %916 = vmatpush1.msra.mxu0 0.0
    %917 = vmatprep.subr.mxu0 0.0
    %918 = vmatpush1.msra.mxu0 0.0
    %919 = vmatprep.subr.mxu0 0.0
    %920 = vmatpush1.msra.mxu0 0.0
    %921 = vmatprep.subr.mxu0 0.0
    %922 = vmatpush1.msra.mxu0 0.0
    %923 = vmatprep.subr.mxu0 0.0
    %924 = vmatpush1.msra.mxu0 %v891
    %925 = vmatprep.subr.mxu0 0.0
    %926 = vmatpush2.msra.mxu0 0.0
    %927 = vmatprep.subr.mxu0 0.0
    %928 = vmatpush2.msra.mxu0 0.0
    %929 = vmatprep.subr.mxu0 0.0
    %930 = vmatpush2.msra.mxu0 0.0
    %931 = vmatprep.subr.mxu0 0.0
    %932 = vmatpush2.msra.mxu0 0.0
    %933 = vmatprep.subr.mxu0 0.0
    %934 = vmatpush2.msra.mxu0 0.0
    %935 = vmatprep.subr.mxu0 0.0
    %936 = vmatpush2.msra.mxu0 0.0
    %937 = vmatprep.subr.mxu0 0.0
    %938 = vmatpush2.msra.mxu0 0.0
    %939 = vmatprep.subr.mxu0 0.0
    %940 = vmatpush2.msra.mxu0 0.0
    %941 = vmatprep.subr.mxu0 0.0
    %942 = vmatpush2.msra.mxu0 0.0
    %943 = vmatprep.subr.mxu0 0.0
    %944 = vmatpush2.msra.mxu0 0.0
    %945 = vmatprep.subr.mxu0 0.0
    %946 = vmatpush2.msra.mxu0 0.0
    %947 = vmatprep.subr.mxu0 0.0
    %948 = vmatpush2.msra.mxu0 0.0
    %949 = vmatprep.subr.mxu0 0.0
    %950 = vmatpush2.msra.mxu0 0.0
    %951 = vmatprep.subr.mxu0 0.0
    %952 = vmatpush2.msra.mxu0 0.0
    %953 = vmatprep.subr.mxu0 0.0
    %954 = vmatpush2.msra.mxu0 0.0
    %955 = vmatprep.subr.mxu0 0.0
    %956 = vmatpush2.msra.mxu0 0.0
    %957 = vmatprep.mubr.f32.mxu0 0.0
    %958 = vmatmul.mubr.f32.gmra.mxu0 %v714
    %v959 = vpop.f32.mrf.mxu0
    %v960 = vadd.f32 1e-05, %v959
    %v961 = vpop.f32.mrf.mxu0
    %962 = vmatprep.mubr.f32.mxu0 0.0
    %963 = vmatmul.mubr.f32.gmra.mxu0 %v717
    %v964 = vpop.f32.mrf.mxu0
    %v965 = vadd.f32 1e-05, %v964
    %v966 = vpop.f32.mrf.mxu0
    %967 = vdwg.mxu0
    %v968 = vrsqrt.pop %v960
    %v969 = vrsqrt.pop %v965
    %v970 = vmul.f32 %v888, %v968
    %v971 = vmul.f32 %v889, %v969
    %v972 = vld [vmem:[#allocation25] sm:$0x1]
    %v974 = vlaneseq
    %v975 = vshrl.u32 %v974, 7
    %v976 = vsub.s32 0, %v975
    %v977 = vrot.slane %v972, %v976
    %v979 = vadd.f32 %v970, %v977
    %v980 = vadd.f32 %v971, %v977
    %v981 = vld [vmem:[%s8] sm:$0xff]
    %v982 = vld [vmem:[%s8 + $0x8] sm:$0xff]
    %v983 = vld [vmem:[%s8 + $0x10] sm:$0xff]
    %v984 = vld [vmem:[%s8 + $0x18] sm:$0xff]
    %v985 = vld [vmem:[%s8 + $0x20] sm:$0xff]
    %v986 = vld [vmem:[%s8 + $0x28] sm:$0xff]
    %v987 = vld [vmem:[%s8 + $0x30] sm:$0xff]
    %v988 = vld [vmem:[%s8 + $0x38] sm:$0xff]
    %v990 = vsel %vm419, %v979, 0
    %v993 = vsel %vm419, %v980, 0
    %995 = vmatprep.subr.mxu0 0.0
    %996 = vmatpush1.msra.mxu0 0.0
    %997 = vmatprep.subr.mxu0 0.0
    %998 = vmatpush1.msra.mxu0 0.0
    %999 = vmatprep.subr.mxu0 0.0
    %1000 = vmatpush1.msra.mxu0 0.0
    %1001 = vmatprep.subr.mxu0 0.0
    %1002 = vmatpush1.msra.mxu0 0.0
    %1003 = vmatprep.subr.mxu0 0.0
    %1004 = vmatpush1.msra.mxu0 0.0
    %1005 = vmatprep.subr.mxu0 0.0
    %1006 = vmatpush1.msra.mxu0 0.0
    %1007 = vmatprep.subr.mxu0 0.0
    %1008 = vmatpush1.msra.mxu0 0.0
    %1009 = vmatprep.subr.mxu0 0.0
    %1010 = vmatpush1.msra.mxu0 0.0
    %1011 = vmatprep.subr.mxu0 0.0
    %1012 = vmatpush1.msra.mxu0 %v988
    %1013 = vmatprep.subr.mxu0 0.0
    %1014 = vmatpush1.msra.mxu0 %v987
    %1015 = vmatprep.subr.mxu0 0.0
    %1016 = vmatpush1.msra.mxu0 %v986
    %1017 = vmatprep.subr.mxu0 0.0
    %1018 = vmatpush1.msra.mxu0 %v985
    %1019 = vmatprep.subr.mxu0 0.0
    %1020 = vmatpush1.msra.mxu0 %v984
    %1021 = vmatprep.subr.mxu0 0.0
    %1022 = vmatpush1.msra.mxu0 %v983
    %1023 = vmatprep.subr.mxu0 0.0
    %1024 = vmatpush1.msra.mxu0 %v982
    %1025 = vmatprep.subr.mxu0 0.0
    %1026 = vmatpush1.msra.mxu0 %v981
    %1027 = vmatprep.subr.mxu0 0.0
    %1028 = vmatpush2.msra.mxu0 0.0
    %1029 = vmatprep.subr.mxu0 0.0
    %1030 = vmatpush2.msra.mxu0 0.0
    %1031 = vmatprep.subr.mxu0 0.0
    %1032 = vmatpush2.msra.mxu0 0.0
    %1033 = vmatprep.subr.mxu0 0.0
    %1034 = vmatpush2.msra.mxu0 0.0
    %1035 = vmatprep.subr.mxu0 0.0
    %1036 = vmatpush2.msra.mxu0 0.0
    %1037 = vmatprep.subr.mxu0 0.0
    %1038 = vmatpush2.msra.mxu0 0.0
    %1039 = vmatprep.subr.mxu0 0.0
    %1040 = vmatpush2.msra.mxu0 0.0
    %1041 = vmatprep.subr.mxu0 0.0
    %1042 = vmatpush2.msra.mxu0 0.0
    %1043 = vmatprep.subr.mxu0 0.0
    %1044 = vmatpush2.msra.mxu0 0.0
    %1045 = vmatprep.subr.mxu0 0.0
    %1046 = vmatpush2.msra.mxu0 0.0
    %1047 = vmatprep.subr.mxu0 0.0
    %1048 = vmatpush2.msra.mxu0 0.0
    %1049 = vmatprep.subr.mxu0 0.0
    %1050 = vmatpush2.msra.mxu0 0.0
    %1051 = vmatprep.subr.mxu0 0.0
    %1052 = vmatpush2.msra.mxu0 0.0
    %1053 = vmatprep.subr.mxu0 0.0
    %1054 = vmatpush2.msra.mxu0 0.0
    %1055 = vmatprep.subr.mxu0 0.0
    %1056 = vmatpush2.msra.mxu0 0.0
    %1057 = vmatprep.subr.mxu0 0.0
    %1058 = vmatpush2.msra.mxu0 0.0
    %1059 = vmatprep.mubr.f32.mxu0 0.0
    %1060 = vmatmul.mubr.f32.gmra.mxu0 %v990
    %v1061 = vpop.f32.mrf.mxu0
    %v1062 = vadd.f32 0.0, %v1061
    %v1063 = vpop.f32.mrf.mxu0
    %1064 = vmatprep.mubr.f32.mxu0 0.0
    %1065 = vmatmul.mubr.f32.gmra.mxu0 %v993
    %v1066 = vpop.f32.mrf.mxu0
    %v1067 = vadd.f32 0.0, %v1066
    %v1068 = vpop.f32.mrf.mxu0
    %1069 = vdwg.mxu0
    %v1070 = vld [vmem:[#allocation16] sm:$0x1]
    %v1072 = vlaneseq
    %v1073 = vshrl.u32 %v1072, 7
    %v1074 = vsub.s32 0, %v1073
    %v1075 = vrot.slane %v1070, %v1074
    %v1077 = vmul.f32 %v1062, %v1075
    %v1078 = vmul.f32 %v1067, %v1075
    %v1079 = vsel %vm419, %v1077, 0.0
    %1080 = vadd.xlane.f32.xlu0 %v1079
    %v1081 = vpop.xlane.xlu0 %1080
    %v1082 = vsel %vm419, %v1078, 0.0
    %1083 = vadd.xlane.f32.xlu0 %v1082
    %v1084 = vpop.xlane.xlu0 %1083
    %v1085 = vld [vmem:[#allocation14] sm:$0x1]
    %v1087 = vsel %vm419, %v1085, 0
    %v1090 = vsel %vm419, %v1062, 0
    %v1093 = vsel %vm419, %v1067, 0
    %1095 = vmatprep.subr.mxu0 0.0
    %1096 = vmatpush1.xpose.msra.mxu0 0.0
    %1097 = vmatprep.subr.mxu0 0.0
    %1098 = vmatpush1.xpose.msra.mxu0 0.0
    %1099 = vmatprep.subr.mxu0 0.0
    %1100 = vmatpush1.xpose.msra.mxu0 0.0
    %1101 = vmatprep.subr.mxu0 0.0
    %1102 = vmatpush1.xpose.msra.mxu0 0.0
    %1103 = vmatprep.subr.mxu0 0.0
    %1104 = vmatpush1.xpose.msra.mxu0 0.0
    %1105 = vmatprep.subr.mxu0 0.0
    %1106 = vmatpush1.xpose.msra.mxu0 0.0
    %1107 = vmatprep.subr.mxu0 0.0
    %1108 = vmatpush1.xpose.msra.mxu0 0.0
    %1109 = vmatprep.subr.mxu0 0.0
    %1110 = vmatpush1.xpose.msra.mxu0 0.0
    %1111 = vmatprep.subr.mxu0 0.0
    %1112 = vmatpush1.xpose.msra.mxu0 0.0
    %1113 = vmatprep.subr.mxu0 0.0
    %1114 = vmatpush1.xpose.msra.mxu0 0.0
    %1115 = vmatprep.subr.mxu0 0.0
    %1116 = vmatpush1.xpose.msra.mxu0 0.0
    %1117 = vmatprep.subr.mxu0 0.0
    %1118 = vmatpush1.xpose.msra.mxu0 0.0
    %1119 = vmatprep.subr.mxu0 0.0
    %1120 = vmatpush1.xpose.msra.mxu0 0.0
    %1121 = vmatprep.subr.mxu0 0.0
    %1122 = vmatpush1.xpose.msra.mxu0 0.0
    %1123 = vmatprep.subr.mxu0 0.0
    %1124 = vmatpush1.xpose.msra.mxu0 %v1093
    %1125 = vmatprep.subr.mxu0 0.0
    %1126 = vmatpush1.xpose.msra.mxu0 %v1090
    %1127 = vmatprep.subr.mxu0 0.0
    %1128 = vmatpush2.xpose.msra.mxu0 0.0
    %1129 = vmatprep.subr.mxu0 0.0
    %1130 = vmatpush2.xpose.msra.mxu0 0.0
    %1131 = vmatprep.subr.mxu0 0.0
    %1132 = vmatpush2.xpose.msra.mxu0 0.0
    %1133 = vmatprep.subr.mxu0 0.0
    %1134 = vmatpush2.xpose.msra.mxu0 0.0
    %1135 = vmatprep.subr.mxu0 0.0
    %1136 = vmatpush2.xpose.msra.mxu0 0.0
    %1137 = vmatprep.subr.mxu0 0.0
    %1138 = vmatpush2.xpose.msra.mxu0 0.0
    %1139 = vmatprep.subr.mxu0 0.0
    %1140 = vmatpush2.xpose.msra.mxu0 0.0
    %1141 = vmatprep.subr.mxu0 0.0
    %1142 = vmatpush2.xpose.msra.mxu0 0.0
    %1143 = vmatprep.subr.mxu0 0.0
    %1144 = vmatpush2.xpose.msra.mxu0 0.0
    %1145 = vmatprep.subr.mxu0 0.0
    %1146 = vmatpush2.xpose.msra.mxu0 0.0
    %1147 = vmatprep.subr.mxu0 0.0
    %1148 = vmatpush2.xpose.msra.mxu0 0.0
    %1149 = vmatprep.subr.mxu0 0.0
    %1150 = vmatpush2.xpose.msra.mxu0 0.0
    %1151 = vmatprep.subr.mxu0 0.0
    %1152 = vmatpush2.xpose.msra.mxu0 0.0
    %1153 = vmatprep.subr.mxu0 0.0
    %1154 = vmatpush2.xpose.msra.mxu0 0.0
    %1155 = vmatprep.subr.mxu0 0.0
    %1156 = vmatpush2.xpose.msra.mxu0 0.0
    %1157 = vmatprep.subr.mxu0 0.0
    %1158 = vmatpush2.xpose.msra.mxu0 0.0
    %1159 = vmatprep.mubr.f32.mxu0 0.0
    %1160 = vmatmul.mubr.f32.gmra.mxu0 %v1087
    %v1161 = vpop.f32.mrf.mxu0
    %v1162 = vadd.f32 0.0, %v1161
    %v1163 = vpop.f32.mrf.mxu0
    %1164 = vdwg.mxu0
    %v1165 = vlaneseq
    %v1166 = vshrl.u32 %v1165, 7
    %v1167 = vsub.s32 0, %v1166
    %v1168 = vrot.slane %v1162, %v1167
    %v1169 = vadd.f32 %v1081, %v1168
    %v1170 = vadd.f32 %v1084, %v1168
    %vm1171 = vcmp.gt.f32.partialorder %v1169, 0.0
    %vm1172 = vcmp.gt.f32.partialorder %v1170, 0.0
    %v1173 = vmul.f32 %v1169, 0.2
    %v1174 = vmul.f32 %v1170, 0.2
    %v1175 = vsel %vm1171, %v1169, %v1173
    %v1176 = vsel %vm1172, %v1170, %v1174
    %v1177 = vsel %vm310, %v1175, -1e+30
    %v1178 = vsel %vm311, %v1176, -1e+30
    %v1179 = vsel %vm520, %v1177, -inf
    %1180 = vmax.xlane.f32.xlu0 %v1179
    %v1181 = vpop.xlane.xlu0 %1180
    %v1182 = vsel %vm520, %v1178, -inf
    %1183 = vmax.xlane.f32.xlu0 %v1182
    %v1184 = vpop.xlane.xlu0 %1183
    %v1185 = vsub.f32 %v1177, %v1181
    %v1186 = vsub.f32 %v1178, %v1184
    %v1187 = vmul.f32 %v1185, 1.442695
    %v1188 = vpow.pop %v1187
    %v1189 = vmul.f32 %v1186, 1.442695
    %v1190 = vpow.pop %v1189
    %v1191 = vsel %vm520, %v1188, 0.0
    %1192 = vadd.xlane.f32.xlu0 %v1191
    %v1193 = vpop.xlane.xlu0 %1192
    %v1194 = vsel %vm520, %v1190, 0.0
    %1195 = vadd.xlane.f32.xlu0 %v1194
    %v1196 = vpop.xlane.xlu0 %1195
    %v1197 = vrcp.pop %v1193
    %v1198 = vrcp.pop %v1196
    %v1199 = vmul.f32 %v1188, %v1197
    %v1200 = vmul.f32 %v1190, %v1198
    %v1201 = vld [vmem:[#allocation17] sm:$0x1]
    %v1203 = vlaneseq
    %v1204 = vshrl.u32 %v1203, 7
    %v1205 = vsub.s32 0, %v1204
    %v1206 = vrot.slane %v1201, %v1205
    %v1209 = vsel %vm520, %v1199, 0
    %v1212 = vsel %vm520, %v1200, 0
    %1214 = vmatprep.subr.mxu0 0.0
    %1215 = vmatpush1.msra.mxu0 0.0
    %1216 = vmatprep.subr.mxu0 0.0
    %1217 = vmatpush1.msra.mxu0 0.0
    %1218 = vmatprep.subr.mxu0 0.0
    %1219 = vmatpush1.msra.mxu0 0.0
    %1220 = vmatprep.subr.mxu0 0.0
    %1221 = vmatpush1.msra.mxu0 0.0
    %1222 = vmatprep.subr.mxu0 0.0
    %1223 = vmatpush1.msra.mxu0 0.0
    %1224 = vmatprep.subr.mxu0 0.0
    %1225 = vmatpush1.msra.mxu0 0.0
    %1226 = vmatprep.subr.mxu0 0.0
    %1227 = vmatpush1.msra.mxu0 0.0
    %1228 = vmatprep.subr.mxu0 0.0
    %1229 = vmatpush1.msra.mxu0 0.0
    %1230 = vmatprep.subr.mxu0 0.0
    %1231 = vmatpush1.msra.mxu0 0.0
    %1232 = vmatprep.subr.mxu0 0.0
    %1233 = vmatpush1.msra.mxu0 0.0
    %1234 = vmatprep.subr.mxu0 0.0
    %1235 = vmatpush1.msra.mxu0 0.0
    %1236 = vmatprep.subr.mxu0 0.0
    %1237 = vmatpush1.msra.mxu0 0.0
    %1238 = vmatprep.subr.mxu0 0.0
    %1239 = vmatpush1.msra.mxu0 0.0
    %1240 = vmatprep.subr.mxu0 0.0
    %1241 = vmatpush1.msra.mxu0 0.0
    %1242 = vmatprep.subr.mxu0 0.0
    %1243 = vmatpush1.msra.mxu0 %v1067
    %1244 = vmatprep.subr.mxu0 0.0
    %1245 = vmatpush1.msra.mxu0 %v1062
    %1246 = vmatprep.subr.mxu0 0.0
    %1247 = vmatpush2.msra.mxu0 0.0
    %1248 = vmatprep.subr.mxu0 0.0
    %1249 = vmatpush2.msra.mxu0 0.0
    %1250 = vmatprep.subr.mxu0 0.0
    %1251 = vmatpush2.msra.mxu0 0.0
    %1252 = vmatprep.subr.mxu0 0.0
    %1253 = vmatpush2.msra.mxu0 0.0
    %1254 = vmatprep.subr.mxu0 0.0
    %1255 = vmatpush2.msra.mxu0 0.0
    %1256 = vmatprep.subr.mxu0 0.0
    %1257 = vmatpush2.msra.mxu0 0.0
    %1258 = vmatprep.subr.mxu0 0.0
    %1259 = vmatpush2.msra.mxu0 0.0
    %1260 = vmatprep.subr.mxu0 0.0
    %1261 = vmatpush2.msra.mxu0 0.0
    %1262 = vmatprep.subr.mxu0 0.0
    %1263 = vmatpush2.msra.mxu0 0.0
    %1264 = vmatprep.subr.mxu0 0.0
    %1265 = vmatpush2.msra.mxu0 0.0
    %1266 = vmatprep.subr.mxu0 0.0
    %1267 = vmatpush2.msra.mxu0 0.0
    %1268 = vmatprep.subr.mxu0 0.0
    %1269 = vmatpush2.msra.mxu0 0.0
    %1270 = vmatprep.subr.mxu0 0.0
    %1271 = vmatpush2.msra.mxu0 0.0
    %1272 = vmatprep.subr.mxu0 0.0
    %1273 = vmatpush2.msra.mxu0 0.0
    %1274 = vmatprep.subr.mxu0 0.0
    %1275 = vmatpush2.msra.mxu0 0.0
    %1276 = vmatprep.subr.mxu0 0.0
    %1277 = vmatpush2.msra.mxu0 0.0
    %1278 = vmatprep.mubr.f32.mxu0 0.0
    %1279 = vmatmul.mubr.f32.gmra.mxu0 %v1209
    %v1280 = vpop.f32.mrf.mxu0
    %v1281 = vadd.f32 %v1206, %v1280
    %v1282 = vpop.f32.mrf.mxu0
    %1283 = vmatprep.mubr.f32.mxu0 0.0
    %1284 = vmatmul.mubr.f32.gmra.mxu0 %v1212
    %v1285 = vpop.f32.mrf.mxu0
    %v1286 = vadd.f32 %v1206, %v1285
    %v1287 = vpop.f32.mrf.mxu0
    %1288 = vdwg.mxu0
    %vm1289 = vcmp.gt.f32.partialorder %v1281, 0.0
    %vm1290 = vcmp.gt.f32.partialorder %v1286, 0.0
    %v1291 = vmul.f32 %v1281, 0.01
    %v1292 = vmul.f32 %v1286, 0.01
    %v1293 = vsel %vm1289, %v1281, %v1291
    %v1294 = vsel %vm1290, %v1286, %v1292
    %v1295 = vld [vmem:[%s12] sm:$0xff]
    %v1296 = vld [vmem:[%s12 + $0x8] sm:$0xff]
    %v1297 = vld [vmem:[%s12 + $0x10] sm:$0xff]
    %v1298 = vld [vmem:[%s12 + $0x18] sm:$0xff]
    %v1299 = vld [vmem:[%s12 + $0x20] sm:$0xff]
    %v1300 = vld [vmem:[%s12 + $0x28] sm:$0xff]
    %v1301 = vld [vmem:[%s12 + $0x30] sm:$0xff]
    %v1302 = vld [vmem:[%s12 + $0x38] sm:$0xff]
    %v1304 = vsel %vm419, %v1293, 0
    %v1307 = vsel %vm419, %v1294, 0
    %1309 = vmatprep.subr.mxu0 0.0
    %1310 = vmatpush1.msra.mxu0 0.0
    %1311 = vmatprep.subr.mxu0 0.0
    %1312 = vmatpush1.msra.mxu0 0.0
    %1313 = vmatprep.subr.mxu0 0.0
    %1314 = vmatpush1.msra.mxu0 0.0
    %1315 = vmatprep.subr.mxu0 0.0
    %1316 = vmatpush1.msra.mxu0 0.0
    %1317 = vmatprep.subr.mxu0 0.0
    %1318 = vmatpush1.msra.mxu0 0.0
    %1319 = vmatprep.subr.mxu0 0.0
    %1320 = vmatpush1.msra.mxu0 0.0
    %1321 = vmatprep.subr.mxu0 0.0
    %1322 = vmatpush1.msra.mxu0 0.0
    %1323 = vmatprep.subr.mxu0 0.0
    %1324 = vmatpush1.msra.mxu0 0.0
    %1325 = vmatprep.subr.mxu0 0.0
    %1326 = vmatpush1.msra.mxu0 %v1302
    %1327 = vmatprep.subr.mxu0 0.0
    %1328 = vmatpush1.msra.mxu0 %v1301
    %1329 = vmatprep.subr.mxu0 0.0
    %1330 = vmatpush1.msra.mxu0 %v1300
    %1331 = vmatprep.subr.mxu0 0.0
    %1332 = vmatpush1.msra.mxu0 %v1299
    %1333 = vmatprep.subr.mxu0 0.0
    %1334 = vmatpush1.msra.mxu0 %v1298
    %1335 = vmatprep.subr.mxu0 0.0
    %1336 = vmatpush1.msra.mxu0 %v1297
    %1337 = vmatprep.subr.mxu0 0.0
    %1338 = vmatpush1.msra.mxu0 %v1296
    %1339 = vmatprep.subr.mxu0 0.0
    %1340 = vmatpush1.msra.mxu0 %v1295
    %1341 = vmatprep.subr.mxu0 0.0
    %1342 = vmatpush2.msra.mxu0 0.0
    %1343 = vmatprep.subr.mxu0 0.0
    %1344 = vmatpush2.msra.mxu0 0.0
    %1345 = vmatprep.subr.mxu0 0.0
    %1346 = vmatpush2.msra.mxu0 0.0
    %1347 = vmatprep.subr.mxu0 0.0
    %1348 = vmatpush2.msra.mxu0 0.0
    %1349 = vmatprep.subr.mxu0 0.0
    %1350 = vmatpush2.msra.mxu0 0.0
    %1351 = vmatprep.subr.mxu0 0.0
    %1352 = vmatpush2.msra.mxu0 0.0
    %1353 = vmatprep.subr.mxu0 0.0
    %1354 = vmatpush2.msra.mxu0 0.0
    %1355 = vmatprep.subr.mxu0 0.0
    %1356 = vmatpush2.msra.mxu0 0.0
    %1357 = vmatprep.subr.mxu0 0.0
    %1358 = vmatpush2.msra.mxu0 0.0
    %1359 = vmatprep.subr.mxu0 0.0
    %1360 = vmatpush2.msra.mxu0 0.0
    %1361 = vmatprep.subr.mxu0 0.0
    %1362 = vmatpush2.msra.mxu0 0.0
    %1363 = vmatprep.subr.mxu0 0.0
    %1364 = vmatpush2.msra.mxu0 0.0
    %1365 = vmatprep.subr.mxu0 0.0
    %1366 = vmatpush2.msra.mxu0 0.0
    %1367 = vmatprep.subr.mxu0 0.0
    %1368 = vmatpush2.msra.mxu0 0.0
    %1369 = vmatprep.subr.mxu0 0.0
    %1370 = vmatpush2.msra.mxu0 0.0
    %1371 = vmatprep.subr.mxu0 0.0
    %1372 = vmatpush2.msra.mxu0 0.0
    %1373 = vmatprep.mubr.f32.mxu0 0.0
    %1374 = vmatmul.mubr.f32.gmra.mxu0 %v1304
    %v1375 = vpop.f32.mrf.mxu0
    %v1376 = vadd.f32 0.0, %v1375
    %v1377 = vpop.f32.mrf.mxu0
    %1378 = vmatprep.mubr.f32.mxu0 0.0
    %1379 = vmatmul.mubr.f32.gmra.mxu0 %v1307
    %v1380 = vpop.f32.mrf.mxu0
    %v1381 = vadd.f32 0.0, %v1380
    %v1382 = vpop.f32.mrf.mxu0
    %1383 = vdwg.mxu0
    %v1384 = vld [vmem:[#allocation20] sm:$0x1]
    %v1386 = vlaneseq
    %v1387 = vshrl.u32 %v1386, 7
    %v1388 = vsub.s32 0, %v1387
    %v1389 = vrot.slane %v1384, %v1388
    %v1391 = vmul.f32 %v1376, %v1389
    %v1392 = vmul.f32 %v1381, %v1389
    %v1393 = vsel %vm419, %v1391, 0.0
    %1394 = vadd.xlane.f32.xlu0 %v1393
    %v1395 = vpop.xlane.xlu0 %1394
    %v1396 = vsel %vm419, %v1392, 0.0
    %1397 = vadd.xlane.f32.xlu0 %v1396
    %v1398 = vpop.xlane.xlu0 %1397
    %v1399 = vld [vmem:[#allocation19] sm:$0x1]
    %v1401 = vsel %vm419, %v1399, 0
    %v1404 = vsel %vm419, %v1376, 0
    %v1407 = vsel %vm419, %v1381, 0
    %1409 = vmatprep.subr.mxu0 0.0
    %1410 = vmatpush1.xpose.msra.mxu0 0.0
    %1411 = vmatprep.subr.mxu0 0.0
    %1412 = vmatpush1.xpose.msra.mxu0 0.0
    %1413 = vmatprep.subr.mxu0 0.0
    %1414 = vmatpush1.xpose.msra.mxu0 0.0
    %1415 = vmatprep.subr.mxu0 0.0
    %1416 = vmatpush1.xpose.msra.mxu0 0.0
    %1417 = vmatprep.subr.mxu0 0.0
    %1418 = vmatpush1.xpose.msra.mxu0 0.0
    %1419 = vmatprep.subr.mxu0 0.0
    %1420 = vmatpush1.xpose.msra.mxu0 0.0
    %1421 = vmatprep.subr.mxu0 0.0
    %1422 = vmatpush1.xpose.msra.mxu0 0.0
    %1423 = vmatprep.subr.mxu0 0.0
    %1424 = vmatpush1.xpose.msra.mxu0 0.0
    %1425 = vmatprep.subr.mxu0 0.0
    %1426 = vmatpush1.xpose.msra.mxu0 0.0
    %1427 = vmatprep.subr.mxu0 0.0
    %1428 = vmatpush1.xpose.msra.mxu0 0.0
    %1429 = vmatprep.subr.mxu0 0.0
    %1430 = vmatpush1.xpose.msra.mxu0 0.0
    %1431 = vmatprep.subr.mxu0 0.0
    %1432 = vmatpush1.xpose.msra.mxu0 0.0
    %1433 = vmatprep.subr.mxu0 0.0
    %1434 = vmatpush1.xpose.msra.mxu0 0.0
    %1435 = vmatprep.subr.mxu0 0.0
    %1436 = vmatpush1.xpose.msra.mxu0 0.0
    %1437 = vmatprep.subr.mxu0 0.0
    %1438 = vmatpush1.xpose.msra.mxu0 %v1407
    %1439 = vmatprep.subr.mxu0 0.0
    %1440 = vmatpush1.xpose.msra.mxu0 %v1404
    %1441 = vmatprep.subr.mxu0 0.0
    %1442 = vmatpush2.xpose.msra.mxu0 0.0
    %1443 = vmatprep.subr.mxu0 0.0
    %1444 = vmatpush2.xpose.msra.mxu0 0.0
    %1445 = vmatprep.subr.mxu0 0.0
    %1446 = vmatpush2.xpose.msra.mxu0 0.0
    %1447 = vmatprep.subr.mxu0 0.0
    %1448 = vmatpush2.xpose.msra.mxu0 0.0
    %1449 = vmatprep.subr.mxu0 0.0
    %1450 = vmatpush2.xpose.msra.mxu0 0.0
    %1451 = vmatprep.subr.mxu0 0.0
    %1452 = vmatpush2.xpose.msra.mxu0 0.0
    %1453 = vmatprep.subr.mxu0 0.0
    %1454 = vmatpush2.xpose.msra.mxu0 0.0
    %1455 = vmatprep.subr.mxu0 0.0
    %1456 = vmatpush2.xpose.msra.mxu0 0.0
    %1457 = vmatprep.subr.mxu0 0.0
    %1458 = vmatpush2.xpose.msra.mxu0 0.0
    %1459 = vmatprep.subr.mxu0 0.0
    %1460 = vmatpush2.xpose.msra.mxu0 0.0
    %1461 = vmatprep.subr.mxu0 0.0
    %1462 = vmatpush2.xpose.msra.mxu0 0.0
    %1463 = vmatprep.subr.mxu0 0.0
    %1464 = vmatpush2.xpose.msra.mxu0 0.0
    %1465 = vmatprep.subr.mxu0 0.0
    %1466 = vmatpush2.xpose.msra.mxu0 0.0
    %1467 = vmatprep.subr.mxu0 0.0
    %1468 = vmatpush2.xpose.msra.mxu0 0.0
    %1469 = vmatprep.subr.mxu0 0.0
    %1470 = vmatpush2.xpose.msra.mxu0 0.0
    %1471 = vmatprep.subr.mxu0 0.0
    %1472 = vmatpush2.xpose.msra.mxu0 0.0
    %1473 = vmatprep.mubr.f32.mxu0 0.0
    %1474 = vmatmul.mubr.f32.gmra.mxu0 %v1401
    %v1475 = vpop.f32.mrf.mxu0
    %v1476 = vadd.f32 0.0, %v1475
    %v1477 = vpop.f32.mrf.mxu0
    %1478 = vdwg.mxu0
    %v1479 = vlaneseq
    %v1480 = vshrl.u32 %v1479, 7
    %v1481 = vsub.s32 0, %v1480
    %v1482 = vrot.slane %v1476, %v1481
    %v1483 = vadd.f32 %v1395, %v1482
    %v1484 = vadd.f32 %v1398, %v1482
    %vm1485 = vcmp.gt.f32.partialorder %v1483, 0.0
    %vm1486 = vcmp.gt.f32.partialorder %v1484, 0.0
    %v1487 = vmul.f32 %v1483, 0.2
    %v1488 = vmul.f32 %v1484, 0.2
    %v1489 = vsel %vm1485, %v1483, %v1487
    %v1490 = vsel %vm1486, %v1484, %v1488
    %v1491 = vsel %vm310, %v1489, -1e+30
    %v1492 = vsel %vm311, %v1490, -1e+30
    %v1493 = vsel %vm520, %v1491, -inf
    %1494 = vmax.xlane.f32.xlu0 %v1493
    %v1495 = vpop.xlane.xlu0 %1494
    %v1496 = vsel %vm520, %v1492, -inf
    %1497 = vmax.xlane.f32.xlu0 %v1496
    %v1498 = vpop.xlane.xlu0 %1497
    %v1499 = vsub.f32 %v1491, %v1495
    %v1500 = vsub.f32 %v1492, %v1498
    %v1501 = vmul.f32 %v1499, 1.442695
    %v1502 = vpow.pop %v1501
    %v1503 = vmul.f32 %v1500, 1.442695
    %v1504 = vpow.pop %v1503
    %v1505 = vsel %vm520, %v1502, 0.0
    %1506 = vadd.xlane.f32.xlu0 %v1505
    %v1507 = vpop.xlane.xlu0 %1506
    %v1508 = vsel %vm520, %v1504, 0.0
    %1509 = vadd.xlane.f32.xlu0 %v1508
    %v1510 = vpop.xlane.xlu0 %1509
    %v1511 = vrcp.pop %v1507
    %v1512 = vrcp.pop %v1510
    %v1513 = vmul.f32 %v1502, %v1511
    %v1514 = vmul.f32 %v1504, %v1512
    %v1515 = vld [vmem:[#allocation22] sm:$0x1]
    %v1517 = vlaneseq
    %v1518 = vshrl.u32 %v1517, 7
    %v1519 = vsub.s32 0, %v1518
    %v1520 = vrot.slane %v1515, %v1519
    %v1523 = vsel %vm520, %v1513, 0
    %v1526 = vsel %vm520, %v1514, 0
    %1528 = vmatprep.subr.mxu0 0.0
    %1529 = vmatpush1.msra.mxu0 0.0
    %1530 = vmatprep.subr.mxu0 0.0
    %1531 = vmatpush1.msra.mxu0 0.0
    %1532 = vmatprep.subr.mxu0 0.0
    %1533 = vmatpush1.msra.mxu0 0.0
    %1534 = vmatprep.subr.mxu0 0.0
    %1535 = vmatpush1.msra.mxu0 0.0
    %1536 = vmatprep.subr.mxu0 0.0
    %1537 = vmatpush1.msra.mxu0 0.0
    %1538 = vmatprep.subr.mxu0 0.0
    %1539 = vmatpush1.msra.mxu0 0.0
    %1540 = vmatprep.subr.mxu0 0.0
    %1541 = vmatpush1.msra.mxu0 0.0
    %1542 = vmatprep.subr.mxu0 0.0
    %1543 = vmatpush1.msra.mxu0 0.0
    %1544 = vmatprep.subr.mxu0 0.0
    %1545 = vmatpush1.msra.mxu0 0.0
    %1546 = vmatprep.subr.mxu0 0.0
    %1547 = vmatpush1.msra.mxu0 0.0
    %1548 = vmatprep.subr.mxu0 0.0
    %1549 = vmatpush1.msra.mxu0 0.0
    %1550 = vmatprep.subr.mxu0 0.0
    %1551 = vmatpush1.msra.mxu0 0.0
    %1552 = vmatprep.subr.mxu0 0.0
    %1553 = vmatpush1.msra.mxu0 0.0
    %1554 = vmatprep.subr.mxu0 0.0
    %1555 = vmatpush1.msra.mxu0 0.0
    %1556 = vmatprep.subr.mxu0 0.0
    %1557 = vmatpush1.msra.mxu0 %v1381
    %1558 = vmatprep.subr.mxu0 0.0
    %1559 = vmatpush1.msra.mxu0 %v1376
    %1560 = vmatprep.subr.mxu0 0.0
    %1561 = vmatpush2.msra.mxu0 0.0
    %1562 = vmatprep.subr.mxu0 0.0
    %1563 = vmatpush2.msra.mxu0 0.0
    %1564 = vmatprep.subr.mxu0 0.0
    %1565 = vmatpush2.msra.mxu0 0.0
    %1566 = vmatprep.subr.mxu0 0.0
    %1567 = vmatpush2.msra.mxu0 0.0
    %1568 = vmatprep.subr.mxu0 0.0
    %1569 = vmatpush2.msra.mxu0 0.0
    %1570 = vmatprep.subr.mxu0 0.0
    %1571 = vmatpush2.msra.mxu0 0.0
    %1572 = vmatprep.subr.mxu0 0.0
    %1573 = vmatpush2.msra.mxu0 0.0
    %1574 = vmatprep.subr.mxu0 0.0
    %1575 = vmatpush2.msra.mxu0 0.0
    %1576 = vmatprep.subr.mxu0 0.0
    %1577 = vmatpush2.msra.mxu0 0.0
    %1578 = vmatprep.subr.mxu0 0.0
    %1579 = vmatpush2.msra.mxu0 0.0
    %1580 = vmatprep.subr.mxu0 0.0
    %1581 = vmatpush2.msra.mxu0 0.0
    %1582 = vmatprep.subr.mxu0 0.0
    %1583 = vmatpush2.msra.mxu0 0.0
    %1584 = vmatprep.subr.mxu0 0.0
    %1585 = vmatpush2.msra.mxu0 0.0
    %1586 = vmatprep.subr.mxu0 0.0
    %1587 = vmatpush2.msra.mxu0 0.0
    %1588 = vmatprep.subr.mxu0 0.0
    %1589 = vmatpush2.msra.mxu0 0.0
    %1590 = vmatprep.subr.mxu0 0.0
    %1591 = vmatpush2.msra.mxu0 0.0
    %1592 = vmatprep.mubr.f32.mxu0 0.0
    %1593 = vmatmul.mubr.f32.gmra.mxu0 %v1523
    %v1594 = vpop.f32.mrf.mxu0
    %v1595 = vadd.f32 %v1520, %v1594
    %v1596 = vpop.f32.mrf.mxu0
    %1597 = vmatprep.mubr.f32.mxu0 0.0
    %1598 = vmatmul.mubr.f32.gmra.mxu0 %v1526
    %v1599 = vpop.f32.mrf.mxu0
    %v1600 = vadd.f32 %v1520, %v1599
    %v1601 = vpop.f32.mrf.mxu0
    %1602 = vdwg.mxu0
    %v1603 = vadd.f32 %v1293, %v1595
    %v1604 = vadd.f32 %v1294, %v1600
    %1605 = vmatprep.subr.mxu0 0.0
    %1606 = vmatpush1.msra.mxu0 0.0
    %1607 = vmatprep.subr.mxu0 0.0
    %1608 = vmatpush1.msra.mxu0 0.0
    %1609 = vmatprep.subr.mxu0 0.0
    %1610 = vmatpush1.msra.mxu0 0.0
    %1611 = vmatprep.subr.mxu0 0.0
    %1612 = vmatpush1.msra.mxu0 0.0
    %1613 = vmatprep.subr.mxu0 0.0
    %1614 = vmatpush1.msra.mxu0 0.0
    %1615 = vmatprep.subr.mxu0 0.0
    %1616 = vmatpush1.msra.mxu0 0.0
    %1617 = vmatprep.subr.mxu0 0.0
    %1618 = vmatpush1.msra.mxu0 0.0
    %1619 = vmatprep.subr.mxu0 0.0
    %1620 = vmatpush1.msra.mxu0 0.0
    %1621 = vmatprep.subr.mxu0 0.0
    %1622 = vmatpush1.msra.mxu0 0.0
    %1623 = vmatprep.subr.mxu0 0.0
    %1624 = vmatpush1.msra.mxu0 0.0
    %1625 = vmatprep.subr.mxu0 0.0
    %1626 = vmatpush1.msra.mxu0 0.0
    %1627 = vmatprep.subr.mxu0 0.0
    %1628 = vmatpush1.msra.mxu0 0.0
    %1629 = vmatprep.subr.mxu0 0.0
    %1630 = vmatpush1.msra.mxu0 0.0
    %1631 = vmatprep.subr.mxu0 0.0
    %1632 = vmatpush1.msra.mxu0 0.0
    %1633 = vmatprep.subr.mxu0 0.0
    %1634 = vmatpush1.msra.mxu0 %v1604
    %1635 = vmatprep.subr.mxu0 0.0
    %1636 = vmatpush1.msra.mxu0 %v1603
    %1637 = vmatprep.subr.mxu0 0.0
    %1638 = vmatpush2.msra.mxu0 0.0
    %1639 = vmatprep.subr.mxu0 0.0
    %1640 = vmatpush2.msra.mxu0 0.0
    %1641 = vmatprep.subr.mxu0 0.0
    %1642 = vmatpush2.msra.mxu0 0.0
    %1643 = vmatprep.subr.mxu0 0.0
    %1644 = vmatpush2.msra.mxu0 0.0
    %1645 = vmatprep.subr.mxu0 0.0
    %1646 = vmatpush2.msra.mxu0 0.0
    %1647 = vmatprep.subr.mxu0 0.0
    %1648 = vmatpush2.msra.mxu0 0.0
    %1649 = vmatprep.subr.mxu0 0.0
    %1650 = vmatpush2.msra.mxu0 0.0
    %1651 = vmatprep.subr.mxu0 0.0
    %1652 = vmatpush2.msra.mxu0 0.0
    %1653 = vmatprep.subr.mxu0 0.0
    %1654 = vmatpush2.msra.mxu0 0.0
    %1655 = vmatprep.subr.mxu0 0.0
    %1656 = vmatpush2.msra.mxu0 0.0
    %1657 = vmatprep.subr.mxu0 0.0
    %1658 = vmatpush2.msra.mxu0 0.0
    %1659 = vmatprep.subr.mxu0 0.0
    %1660 = vmatpush2.msra.mxu0 0.0
    %1661 = vmatprep.subr.mxu0 0.0
    %1662 = vmatpush2.msra.mxu0 0.0
    %1663 = vmatprep.subr.mxu0 0.0
    %1664 = vmatpush2.msra.mxu0 0.0
    %1665 = vmatprep.subr.mxu0 0.0
    %1666 = vmatpush2.msra.mxu0 0.0
    %1667 = vmatprep.subr.mxu0 0.0
    %1668 = vmatpush2.msra.mxu0 0.0
    %1669 = vmatprep.mubr.f32.mxu0 0.0
    %1670 = vmatmul.mubr.f32.gmra.mxu0 %v638
    %v1671 = vpop.f32.mrf.mxu0
    %v1672 = vadd.f32 0.0, %v1671
    %v1673 = vpop.f32.mrf.mxu0
    %1674 = vdwg.mxu0
    %v1675 = vmul.f32 %v1672, %v319
    %v1676 = vld [vmem:[%s19] sm:$0xff]
    %v1677 = vld [vmem:[%s19 + $0x8] sm:$0xff]
    %v1678 = vld [vmem:[%s19 + $0x10] sm:$0xff]
    %v1679 = vld [vmem:[%s19 + $0x18] sm:$0xff]
    %v1680 = vld [vmem:[%s19 + $0x20] sm:$0xff]
    %v1681 = vld [vmem:[%s19 + $0x28] sm:$0xff]
    %v1682 = vld [vmem:[%s19 + $0x30] sm:$0xff]
    %v1683 = vld [vmem:[%s19 + $0x38] sm:$0xff]
    %v1684 = vmul.f32 %v1676, %v1676
    %v1685 = vmul.f32 %v1677, %v1677
    %v1686 = vmul.f32 %v1678, %v1678
    %v1687 = vmul.f32 %v1679, %v1679
    %v1688 = vmul.f32 %v1680, %v1680
    %v1689 = vmul.f32 %v1681, %v1681
    %v1690 = vmul.f32 %v1682, %v1682
    %v1691 = vmul.f32 %v1683, %v1683
    %v1692 = vsel %vm324, %v1684, 0.0
    %v1693 = vsel %vm324, %v1685, 0.0
    %v1694 = vadd.f32 %v1692, %v1693
    %v1695 = vsel %vm324, %v1686, 0.0
    %v1696 = vadd.f32 %v1694, %v1695
    %v1697 = vsel %vm324, %v1687, 0.0
    %v1698 = vadd.f32 %v1696, %v1697
    %v1699 = vsel %vm324, %v1688, 0.0
    %v1700 = vadd.f32 %v1698, %v1699
    %v1701 = vsel %vm324, %v1689, 0.0
    %v1702 = vadd.f32 %v1700, %v1701
    %v1703 = vsel %vm324, %v1690, 0.0
    %v1704 = vadd.f32 %v1702, %v1703
    %v1705 = vsel %vm324, %v1691, 0.0
    %v1706 = vadd.f32 %v1704, %v1705
    %v1707 = vrot.slane %v1706, 4
    %v1708 = vadd.f32 %v1706, %v1707
    %v1709 = vrot.slane %v1708, 2
    %v1710 = vadd.f32 %v1708, %v1709
    %v1711 = vrot.slane %v1710, 1
    %v1712 = vadd.f32 %v1710, %v1711
    %v1713 = vmul.f32 %v1675, %v1675
    %vm1714 = vcmask 517120
    %v1715 = vsel %vm1714, %v1713, 0.0
    %1716 = vadd.xlane.f32.xlu0 %v1715
    %v1717 = vpop.xlane.xlu0 %1716
    %v1719 = vsel %vm419, %v1675, 0
    %1721 = vmatprep.subr.mxu0 0.0
    %1722 = vmatpush1.msra.mxu0 0.0
    %1723 = vmatprep.subr.mxu0 0.0
    %1724 = vmatpush1.msra.mxu0 0.0
    %1725 = vmatprep.subr.mxu0 0.0
    %1726 = vmatpush1.msra.mxu0 0.0
    %1727 = vmatprep.subr.mxu0 0.0
    %1728 = vmatpush1.msra.mxu0 0.0
    %1729 = vmatprep.subr.mxu0 0.0
    %1730 = vmatpush1.msra.mxu0 0.0
    %1731 = vmatprep.subr.mxu0 0.0
    %1732 = vmatpush1.msra.mxu0 0.0
    %1733 = vmatprep.subr.mxu0 0.0
    %1734 = vmatpush1.msra.mxu0 0.0
    %1735 = vmatprep.subr.mxu0 0.0
    %1736 = vmatpush1.msra.mxu0 0.0
    %1737 = vmatprep.subr.mxu0 0.0
    %1738 = vmatpush1.msra.mxu0 %v1683
    %1739 = vmatprep.subr.mxu0 0.0
    %1740 = vmatpush1.msra.mxu0 %v1682
    %1741 = vmatprep.subr.mxu0 0.0
    %1742 = vmatpush1.msra.mxu0 %v1681
    %1743 = vmatprep.subr.mxu0 0.0
    %1744 = vmatpush1.msra.mxu0 %v1680
    %1745 = vmatprep.subr.mxu0 0.0
    %1746 = vmatpush1.msra.mxu0 %v1679
    %1747 = vmatprep.subr.mxu0 0.0
    %1748 = vmatpush1.msra.mxu0 %v1678
    %1749 = vmatprep.subr.mxu0 0.0
    %1750 = vmatpush1.msra.mxu0 %v1677
    %1751 = vmatprep.subr.mxu0 0.0
    %1752 = vmatpush1.msra.mxu0 %v1676
    %1753 = vmatprep.subr.mxu0 0.0
    %1754 = vmatpush2.msra.mxu0 0.0
    %1755 = vmatprep.subr.mxu0 0.0
    %1756 = vmatpush2.msra.mxu0 0.0
    %1757 = vmatprep.subr.mxu0 0.0
    %1758 = vmatpush2.msra.mxu0 0.0
    %1759 = vmatprep.subr.mxu0 0.0
    %1760 = vmatpush2.msra.mxu0 0.0
    %1761 = vmatprep.subr.mxu0 0.0
    %1762 = vmatpush2.msra.mxu0 0.0
    %1763 = vmatprep.subr.mxu0 0.0
    %1764 = vmatpush2.msra.mxu0 0.0
    %1765 = vmatprep.subr.mxu0 0.0
    %1766 = vmatpush2.msra.mxu0 0.0
    %1767 = vmatprep.subr.mxu0 0.0
    %1768 = vmatpush2.msra.mxu0 0.0
    %1769 = vmatprep.subr.mxu0 0.0
    %1770 = vmatpush2.msra.mxu0 0.0
    %1771 = vmatprep.subr.mxu0 0.0
    %1772 = vmatpush2.msra.mxu0 0.0
    %1773 = vmatprep.subr.mxu0 0.0
    %1774 = vmatpush2.msra.mxu0 0.0
    %1775 = vmatprep.subr.mxu0 0.0
    %1776 = vmatpush2.msra.mxu0 0.0
    %1777 = vmatprep.subr.mxu0 0.0
    %1778 = vmatpush2.msra.mxu0 0.0
    %1779 = vmatprep.subr.mxu0 0.0
    %1780 = vmatpush2.msra.mxu0 0.0
    %1781 = vmatprep.subr.mxu0 0.0
    %1782 = vmatpush2.msra.mxu0 0.0
    %1783 = vmatprep.subr.mxu0 0.0
    %1784 = vmatpush2.msra.mxu0 0.0
    %1785 = vmatprep.mubr.f32.mxu0 0.0
    %1786 = vmatmul.mubr.f32.gmra.mxu0 %v1719
    %v1787 = vpop.f32.mrf.mxu0
    %v1788 = vadd.f32 0.0, %v1787
    %v1789 = vpop.f32.mrf.mxu0
    %1790 = vdwg.mxu0
    %v1791 = vmul.f32 %v1788, 2.0
    %v1792 = vsub.f32 %v1717, %v1791
    %v1793 = vadd.f32 %v1792, %v1712
    %v1794 = vlaneseq
    %v1795 = vand.u32 %v1794, 127
    %vm1796 = vcmask 66560
    %v1797 = vsel %vm1796, %v1793, inf
    %1798 = vmin.xlane.f32.xlu0 %v1797
    %v1799 = vpop.xlane.xlu0 %1798
    %vm1800 = vcmp.le.f32.partialorder %v1793, %v1799
    %v1801 = vsel %vm1800, %v1795, 9
    %v1802 = vsel %vm1796, %v1801, 2147483647
    %v1803 = vand.u32 %v1802, 65535
    %v1804 = vshra.s32 %v1802, 16
    %v1805 = vcvt.s32.f32 %v1803
    %v1806 = vcvt.s32.f32 %v1804
    %1807 = vmin.xlane.f32.xlu0 %v1806
    %v1808 = vpop.xlane.xlu0 %1807
    %vm1809 = vcmp.eq.f32.partialorder %v1806, %v1808
    %v1810 = vsel %vm1809, %v1805, inf
    %1811 = vmin.xlane.f32.xlu0 %v1810
    %v1812 = vpop.xlane.xlu0 %1811
    %v1813 = vcvt.f32.s32 %v1812
    %v1814 = vcvt.f32.s32 %v1808
    %v1815 = vshll.u32 %v1814, 16
    %v1816 = vadd.s32 %v1815, %v1813
    %vm1817 = vcmp.eq.s32.totalorder %v1795, %v1816
    %v1818 = vsel %vm1817, 1, 0
    %v1819 = vcvt.s32.f32 %v1818
    %v1820 = vld [vmem:[%s20] sm:$0xff]
    %v1821 = vld [vmem:[%s20 + $0x8] sm:$0xff]
    %v1822 = vld [vmem:[%s20 + $0x10] sm:$0xff]
    %v1823 = vld [vmem:[%s20 + $0x18] sm:$0xff]
    %v1824 = vld [vmem:[%s20 + $0x20] sm:$0xff]
    %v1825 = vld [vmem:[%s20 + $0x28] sm:$0xff]
    %v1826 = vld [vmem:[%s20 + $0x30] sm:$0xff]
    %v1827 = vld [vmem:[%s20 + $0x38] sm:$0xff]
    %v1828 = vld [vmem:[#allocation28] sm:$0xff]
    %v1829 = vld [vmem:[#allocation28 + $0x8] sm:$0x1]
    %v1831 = vsel %vm324, %v1819, 0
    %v1834 = vsel %vm331, %v1829, 0
    %1836 = vmatprep.subr.mxu0 0.0
    %1837 = vmatpush1.msra.mxu0 0.0
    %1838 = vmatprep.subr.mxu0 0.0
    %1839 = vmatpush1.msra.mxu0 0.0
    %1840 = vmatprep.subr.mxu0 0.0
    %1841 = vmatpush1.msra.mxu0 0.0
    %1842 = vmatprep.subr.mxu0 0.0
    %1843 = vmatpush1.msra.mxu0 0.0
    %1844 = vmatprep.subr.mxu0 0.0
    %1845 = vmatpush1.msra.mxu0 0.0
    %1846 = vmatprep.subr.mxu0 0.0
    %1847 = vmatpush1.msra.mxu0 0.0
    %1848 = vmatprep.subr.mxu0 0.0
    %1849 = vmatpush1.msra.mxu0 0.0
    %1850 = vmatprep.subr.mxu0 0.0
    %1851 = vmatpush1.msra.mxu0 0.0
    %1852 = vmatprep.subr.mxu0 0.0
    %1853 = vmatpush1.msra.mxu0 0.0
    %1854 = vmatprep.subr.mxu0 0.0
    %1855 = vmatpush1.msra.mxu0 0.0
    %1856 = vmatprep.subr.mxu0 0.0
    %1857 = vmatpush1.msra.mxu0 0.0
    %1858 = vmatprep.subr.mxu0 0.0
    %1859 = vmatpush1.msra.mxu0 0.0
    %1860 = vmatprep.subr.mxu0 0.0
    %1861 = vmatpush1.msra.mxu0 0.0
    %1862 = vmatprep.subr.mxu0 0.0
    %1863 = vmatpush1.msra.mxu0 0.0
    %1864 = vmatprep.subr.mxu0 0.0
    %1865 = vmatpush1.msra.mxu0 %v1834
    %1866 = vmatprep.subr.mxu0 0.0
    %1867 = vmatpush1.msra.mxu0 %v1828
    %1868 = vmatprep.subr.mxu0 0.0
    %1869 = vmatpush2.msra.mxu0 0.0
    %1870 = vmatprep.subr.mxu0 0.0
    %1871 = vmatpush2.msra.mxu0 0.0
    %1872 = vmatprep.subr.mxu0 0.0
    %1873 = vmatpush2.msra.mxu0 0.0
    %1874 = vmatprep.subr.mxu0 0.0
    %1875 = vmatpush2.msra.mxu0 0.0
    %1876 = vmatprep.subr.mxu0 0.0
    %1877 = vmatpush2.msra.mxu0 0.0
    %1878 = vmatprep.subr.mxu0 0.0
    %1879 = vmatpush2.msra.mxu0 0.0
    %1880 = vmatprep.subr.mxu0 0.0
    %1881 = vmatpush2.msra.mxu0 0.0
    %1882 = vmatprep.subr.mxu0 0.0
    %1883 = vmatpush2.msra.mxu0 0.0
    %1884 = vmatprep.subr.mxu0 0.0
    %1885 = vmatpush2.msra.mxu0 0.0
    %1886 = vmatprep.subr.mxu0 0.0
    %1887 = vmatpush2.msra.mxu0 0.0
    %1888 = vmatprep.subr.mxu0 0.0
    %1889 = vmatpush2.msra.mxu0 0.0
    %1890 = vmatprep.subr.mxu0 0.0
    %1891 = vmatpush2.msra.mxu0 0.0
    %1892 = vmatprep.subr.mxu0 0.0
    %1893 = vmatpush2.msra.mxu0 0.0
    %1894 = vmatprep.subr.mxu0 0.0
    %1895 = vmatpush2.msra.mxu0 0.0
    %1896 = vmatprep.subr.mxu0 0.0
    %1897 = vmatpush2.msra.mxu0 0.0
    %1898 = vmatprep.subr.mxu0 0.0
    %1899 = vmatpush2.msra.mxu0 0.0
    %1900 = vmatprep.mubr.f32.mxu0 0.0
    %1901 = vmatmul.mubr.f32.gmra.mxu0 %v1831
    %v1902 = vpop.f32.mrf.mxu0
    %v1903 = vadd.f32 0.0, %v1902
    %v1904 = vpop.f32.mrf.mxu0
    %1905 = vdwg.mxu0
    %1906 = vmatprep.subr.mxu0 0.0
    %1907 = vmatpush1.msra.mxu0 0.0
    %1908 = vmatprep.subr.mxu0 0.0
    %1909 = vmatpush1.msra.mxu0 0.0
    %1910 = vmatprep.subr.mxu0 0.0
    %1911 = vmatpush1.msra.mxu0 0.0
    %1912 = vmatprep.subr.mxu0 0.0
    %1913 = vmatpush1.msra.mxu0 0.0
    %1914 = vmatprep.subr.mxu0 0.0
    %1915 = vmatpush1.msra.mxu0 0.0
    %1916 = vmatprep.subr.mxu0 0.0
    %1917 = vmatpush1.msra.mxu0 0.0
    %1918 = vmatprep.subr.mxu0 0.0
    %1919 = vmatpush1.msra.mxu0 0.0
    %1920 = vmatprep.subr.mxu0 0.0
    %1921 = vmatpush1.msra.mxu0 0.0
    %1922 = vmatprep.subr.mxu0 0.0
    %1923 = vmatpush1.msra.mxu0 %v1827
    %1924 = vmatprep.subr.mxu0 0.0
    %1925 = vmatpush1.msra.mxu0 %v1826
    %1926 = vmatprep.subr.mxu0 0.0
    %1927 = vmatpush1.msra.mxu0 %v1825
    %1928 = vmatprep.subr.mxu0 0.0
    %1929 = vmatpush1.msra.mxu0 %v1824
    %1930 = vmatprep.subr.mxu0 0.0
    %1931 = vmatpush1.msra.mxu0 %v1823
    %1932 = vmatprep.subr.mxu0 0.0
    %1933 = vmatpush1.msra.mxu0 %v1822
    %1934 = vmatprep.subr.mxu0 0.0
    %1935 = vmatpush1.msra.mxu0 %v1821
    %1936 = vmatprep.subr.mxu0 0.0
    %1937 = vmatpush1.msra.mxu0 %v1820
    %1938 = vmatprep.subr.mxu0 0.0
    %1939 = vmatpush2.msra.mxu0 0.0
    %1940 = vmatprep.subr.mxu0 0.0
    %1941 = vmatpush2.msra.mxu0 0.0
    %1942 = vmatprep.subr.mxu0 0.0
    %1943 = vmatpush2.msra.mxu0 0.0
    %1944 = vmatprep.subr.mxu0 0.0
    %1945 = vmatpush2.msra.mxu0 0.0
    %1946 = vmatprep.subr.mxu0 0.0
    %1947 = vmatpush2.msra.mxu0 0.0
    %1948 = vmatprep.subr.mxu0 0.0
    %1949 = vmatpush2.msra.mxu0 0.0
    %1950 = vmatprep.subr.mxu0 0.0
    %1951 = vmatpush2.msra.mxu0 0.0
    %1952 = vmatprep.subr.mxu0 0.0
    %1953 = vmatpush2.msra.mxu0 0.0
    %1954 = vmatprep.subr.mxu0 0.0
    %1955 = vmatpush2.msra.mxu0 0.0
    %1956 = vmatprep.subr.mxu0 0.0
    %1957 = vmatpush2.msra.mxu0 0.0
    %1958 = vmatprep.subr.mxu0 0.0
    %1959 = vmatpush2.msra.mxu0 0.0
    %1960 = vmatprep.subr.mxu0 0.0
    %1961 = vmatpush2.msra.mxu0 0.0
    %1962 = vmatprep.subr.mxu0 0.0
    %1963 = vmatpush2.msra.mxu0 0.0
    %1964 = vmatprep.subr.mxu0 0.0
    %1965 = vmatpush2.msra.mxu0 0.0
    %1966 = vmatprep.subr.mxu0 0.0
    %1967 = vmatpush2.msra.mxu0 0.0
    %1968 = vmatprep.subr.mxu0 0.0
    %1969 = vmatpush2.msra.mxu0 0.0
    %1970 = vmatprep.mubr.f32.mxu0 0.0
    %1971 = vmatmul.mubr.f32.gmra.mxu0 %v1719
    %v1972 = vpop.f32.mrf.mxu0
    %v1973 = vadd.f32 %v1903, %v1972
    %v1974 = vpop.f32.mrf.mxu0
    %1975 = vdwg.mxu0
    %v1976 = vld [vmem:[#allocation29] sm:$0x1]
    %v1978 = vlaneseq
    %v1979 = vshrl.u32 %v1978, 7
    %v1980 = vsub.s32 0, %v1979
    %v1981 = vrot.slane %v1976, %v1980
    %v1983 = vadd.f32 %v1973, %v1981
    %v1984 = vmax.f32 %v1983, 0.0
    %v1985 = vld [vmem:[%s23] sm:$0xff]
    %v1986 = vld [vmem:[%s23 + $0x8] sm:$0xff]
    %v1987 = vld [vmem:[%s23 + $0x10] sm:$0xff]
    %v1988 = vld [vmem:[%s23 + $0x18] sm:$0xff]
    %v1989 = vld [vmem:[%s23 + $0x20] sm:$0xff]
    %v1990 = vld [vmem:[%s23 + $0x28] sm:$0xff]
    %v1991 = vld [vmem:[%s23 + $0x30] sm:$0xff]
    %v1992 = vld [vmem:[%s23 + $0x38] sm:$0xff]
    %v1993 = vld [vmem:[#allocation31] sm:$0x1]
    %v1995 = vlaneseq
    %v1996 = vshrl.u32 %v1995, 7
    %v1997 = vsub.s32 0, %v1996
    %v1998 = vrot.slane %v1993, %v1997
    %v2001 = vsel %vm419, %v1984, 0
    %2003 = vmatprep.subr.mxu0 0.0
    %2004 = vmatpush1.msra.mxu0 0.0
    %2005 = vmatprep.subr.mxu0 0.0
    %2006 = vmatpush1.msra.mxu0 0.0
    %2007 = vmatprep.subr.mxu0 0.0
    %2008 = vmatpush1.msra.mxu0 0.0
    %2009 = vmatprep.subr.mxu0 0.0
    %2010 = vmatpush1.msra.mxu0 0.0
    %2011 = vmatprep.subr.mxu0 0.0
    %2012 = vmatpush1.msra.mxu0 0.0
    %2013 = vmatprep.subr.mxu0 0.0
    %2014 = vmatpush1.msra.mxu0 0.0
    %2015 = vmatprep.subr.mxu0 0.0
    %2016 = vmatpush1.msra.mxu0 0.0
    %2017 = vmatprep.subr.mxu0 0.0
    %2018 = vmatpush1.msra.mxu0 0.0
    %2019 = vmatprep.subr.mxu0 0.0
    %2020 = vmatpush1.msra.mxu0 %v1992
    %2021 = vmatprep.subr.mxu0 0.0
    %2022 = vmatpush1.msra.mxu0 %v1991
    %2023 = vmatprep.subr.mxu0 0.0
    %2024 = vmatpush1.msra.mxu0 %v1990
    %2025 = vmatprep.subr.mxu0 0.0
    %2026 = vmatpush1.msra.mxu0 %v1989
    %2027 = vmatprep.subr.mxu0 0.0
    %2028 = vmatpush1.msra.mxu0 %v1988
    %2029 = vmatprep.subr.mxu0 0.0
    %2030 = vmatpush1.msra.mxu0 %v1987
    %2031 = vmatprep.subr.mxu0 0.0
    %2032 = vmatpush1.msra.mxu0 %v1986
    %2033 = vmatprep.subr.mxu0 0.0
    %2034 = vmatpush1.msra.mxu0 %v1985
    %2035 = vmatprep.subr.mxu0 0.0
    %2036 = vmatpush2.msra.mxu0 0.0
    %2037 = vmatprep.subr.mxu0 0.0
    %2038 = vmatpush2.msra.mxu0 0.0
    %2039 = vmatprep.subr.mxu0 0.0
    %2040 = vmatpush2.msra.mxu0 0.0
    %2041 = vmatprep.subr.mxu0 0.0
    %2042 = vmatpush2.msra.mxu0 0.0
    %2043 = vmatprep.subr.mxu0 0.0
    %2044 = vmatpush2.msra.mxu0 0.0
    %2045 = vmatprep.subr.mxu0 0.0
    %2046 = vmatpush2.msra.mxu0 0.0
    %2047 = vmatprep.subr.mxu0 0.0
    %2048 = vmatpush2.msra.mxu0 0.0
    %2049 = vmatprep.subr.mxu0 0.0
    %2050 = vmatpush2.msra.mxu0 0.0
    %2051 = vmatprep.subr.mxu0 0.0
    %2052 = vmatpush2.msra.mxu0 0.0
    %2053 = vmatprep.subr.mxu0 0.0
    %2054 = vmatpush2.msra.mxu0 0.0
    %2055 = vmatprep.subr.mxu0 0.0
    %2056 = vmatpush2.msra.mxu0 0.0
    %2057 = vmatprep.subr.mxu0 0.0
    %2058 = vmatpush2.msra.mxu0 0.0
    %2059 = vmatprep.subr.mxu0 0.0
    %2060 = vmatpush2.msra.mxu0 0.0
    %2061 = vmatprep.subr.mxu0 0.0
    %2062 = vmatpush2.msra.mxu0 0.0
    %2063 = vmatprep.subr.mxu0 0.0
    %2064 = vmatpush2.msra.mxu0 0.0
    %2065 = vmatprep.subr.mxu0 0.0
    %2066 = vmatpush2.msra.mxu0 0.0
    %2067 = vmatprep.mubr.f32.mxu0 0.0
    %2068 = vmatmul.mubr.f32.gmra.mxu0 %v2001
    %v2069 = vpop.f32.mrf.mxu0
    %v2070 = vadd.f32 %v1998, %v2069
    %v2071 = vpop.f32.mrf.mxu0
    %2072 = vdwg.mxu0
    %vm2073 = vcmask 25600
    %2074 = vst.msk [vmem:[#allocation32] sm:$0x3] %vm2073, %v2070
    // Predicated region
    $region178: #{multi_property_predictor.1} parent=1 // pred_check
      _
    $region179: #{multi_property_predictor.1} parent=1 // pred_check_branch
      %2076 = sbr.rel (0) target = $region181
    $region180: #{multi_property_predictor.1} parent=1 // pred_region
      %s2078 = ssub.s32 32, 32
      %2079 = vsyncadd [#allocation4], %s2078
      %s2081 = sshll.u32 [#allocation32], 4
      %s2082 = int_to_ptr.vmem [resolvable:$true] %s2081
      %2084 = dma.vmem_to_hbm [thread:$0]  %s2082, 32, %s25, [#allocation4]
    $region181: #{multi_property_predictor.1} parent=1 // pred_fallthru
      _
    // Predicated region
    $region182: #{multi_property_predictor.1} parent=1 // pred_check
      _
    $region183: #{multi_property_predictor.1} parent=1 // pred_check_branch
      %2086 = sbr.rel (0) target = $region185
    $region184: #{multi_property_predictor.1} parent=1 // pred_region
      %2087 = dma.done [#allocation4], 32
    $region185: #{multi_property_predictor.1} parent=1 // pred_fallthru
      _
    %2088 = vsyncpa [#allocation3], 1
    %2089 = vsyncpa [#allocation6], 1
    %2090 = vsyncpa [#allocation9], 1
    %2091 = vsyncpa [#allocation12], 1
    %2092 = vsyncpa [#allocation15], 1
    %2093 = vsyncpa [#allocation18], 1
    %2094 = vsyncpa [#allocation21], 1
    %2095 = vsyncpa [#allocation24], 1
    %2096 = vsyncpa [#allocation27], 1
    %2097 = vsyncpa [#allocation30], 1
    %2098 = vsyncpa [#allocation4], 1

</llo_original>
